<compile_context>
chip_gen: v7x
topology: tpu7x:2x2x1
jax: 0.10.0
libtpu: 0.0.40
codegen_flags: <defaults>
</compile_context>

<pallas_src>
import jax
import jax.numpy as jnp
from jax.experimental import pallas as pl
from jax.experimental.pallas import tpu as pltpu


def _round_up(n, m):
    return ((n + m - 1) // m) * m


def _vmem_bytes_estimate(tile_t, b_pad, f, h, mm_bytes):
    g4 = 4 * h
    x_block = 2 * tile_t * b_pad * f * mm_bytes      # double-buffered x chunk
    weights = (f * g4 + h * g4) * mm_bytes           # W_ih^T, W_hh^T
    biases = (g4 + h + 2) * 4                        # fused bias, W_lin^T, b_lin
    hc_scr = 2 * b_pad * h * 4                       # h / c carries
    gates = tile_t * b_pad * g4 * 4                  # hoisted projection (f32)
    out_blk = 2 * b_pad * 4
    return x_block + weights + biases + hc_scr + gates + out_blk


def _pick_tile_t(T, b_pad, f, h, mm_bytes, tile_t):
    if tile_t is not None:
        return max(1, min(int(tile_t), T))
    tile = min(T, 64)
    budget = 12 * 2**20  # conservative scoped-VMEM slice (fits v5e default w/ margin)
    while tile > 1 and _vmem_bytes_estimate(tile, b_pad, f, h, mm_bytes) > budget:
        tile = (tile + 1) // 2
    return tile


def _make_lstm_kernel(*, seq_len, tile_t, b_pad, hidden, needs_mask):
    H = hidden

    def kernel(x_ref, wih_ref, whh_ref, b_ref, wlin_ref, blin_ref,
               out_ref, h_scr, c_scr):
        # x_ref:    (tile_t * b_pad, F)  time-major flat chunk (bf16/f32)
        # wih_ref:  (F, 4H) = W_ih^T     whh_ref: (H, 4H) = W_hh^T
        # b_ref:    (1, 4H) = b_ih + b_hh
        # wlin_ref: (H, 1)  = W_lin^T    blin_ref: (1, 1)
        # out_ref:  (b_pad, 1)           h_scr/c_scr: (b_pad, H) f32 carries
        chunk = pl.program_id(0)

        @pl.when(chunk == 0)
        def _init():
            h_scr[...] = jnp.zeros_like(h_scr)
            c_scr[...] = jnp.zeros_like(c_scr)

        # Hoisted input projection: one big-M MXU call + one bias broadcast per chunk.
        gates_x = (jnp.dot(x_ref[...], wih_ref[...],
                           preferred_element_type=jnp.float32)
                   + b_ref[...])                       # (tile_t*b_pad, 4H) f32

        whh = whh_ref[...]                             # loaded once per chunk
        h = h_scr[...]
        c = c_scr[...]

        # Fully unrolled recurrence over the chunk (tile_t is small & static).
        # Only the tiny (b_pad, H) @ (H, 4H) matmul remains inside the step.
        for t in range(tile_t):
            z = gates_x[t * b_pad:(t + 1) * b_pad, :] + jnp.dot(
                h.astype(whh.dtype), whh, preferred_element_type=jnp.float32)
            # One full-width (4H-lane) sigmoid on the EUP; discarding the g columns
            # is cheaper than three separate H-lane sigmoids.
            sig = jax.nn.sigmoid(z)
            i_g = sig[:, 0 * H:1 * H]
            f_g = sig[:, 1 * H:2 * H]
            o_g = sig[:, 3 * H:4 * H]
            g_g = jnp.tanh(z[:, 2 * H:3 * H])
            c_n = f_g * c + i_g * g_g
            h_n = o_g * jnp.tanh(c_n)
            if needs_mask:  # static Python bool: only emitted for ragged last chunk
                valid = (chunk * tile_t + t) < seq_len
                h_n = jnp.where(valid, h_n, h)
                c_n = jnp.where(valid, c_n, c)
            h, c = h_n, c_n

        h_scr[...] = h
        c_scr[...] = c

        @pl.when(chunk == pl.num_programs(0) - 1)
        def _finalize():
            out_ref[...] = (jnp.dot(h_scr[...], wlin_ref[...],
                                    preferred_element_type=jnp.float32)
                            + blin_ref[...])

    return kernel


def shallow_regression_lstm_forward(x, params, *, tile_t=None,
                                    matmul_dtype=jnp.bfloat16):
    """x: (batch, seq, num_sensors) float32 -> (batch,) float32."""
    w_ih, w_hh = params["w_ih"], params["w_hh"]
    b_ih, b_hh = params["b_ih"], params["b_hh"]
    w_lin, b_lin = params["w_lin"], params["b_lin"]

    B, T, F = x.shape
    H = w_hh.shape[1]
    G = 4 * H

    # Pad batch to a sublane multiple (better vreg occupancy, MXU M >= 8).
    Bp = _round_up(max(B, 1), 8)

    mm_bytes = jnp.dtype(matmul_dtype).itemsize
    tile_T = _pick_tile_t(T, Bp, F, H, mm_bytes, tile_t)
    num_chunks = pl.cdiv(T, tile_T)
    needs_mask = (T % tile_T) != 0

    # Time-major, batch-padded, flattened input: row t*Bp + b  <->  (t, b).
    # One XLA copy of x; in exchange every per-step slice in the kernel is a
    # contiguous, 8-sublane-aligned static slice.
    xp = x.astype(matmul_dtype)
    if Bp != B:
        xp = jnp.pad(xp, ((0, Bp - B), (0, 0), (0, 0)))
    x_flat = jnp.transpose(xp, (1, 0, 2)).reshape(T * Bp, F)

    wih_t = jnp.transpose(w_ih).astype(matmul_dtype)         # (F, 4H)
    whh_t = jnp.transpose(w_hh).astype(matmul_dtype)         # (H, 4H)
    b = (b_ih + b_hh).reshape(1, G).astype(jnp.float32)      # fused bias
    wlin_t = jnp.transpose(w_lin).astype(jnp.float32)        # (H, 1)
    blin = b_lin.reshape(1, 1).astype(jnp.float32)           # (1, 1)

    est = _vmem_bytes_estimate(tile_T, Bp, F, H, mm_bytes)
    vmem_limit = int(min(32 * 2**20, max(2 * est + (1 << 20), 4 * 2**20)))

    kernel = _make_lstm_kernel(seq_len=T, tile_t=tile_T, b_pad=Bp, hidden=H,
                               needs_mask=needs_mask)

    out = pl.pallas_call(
        kernel,
        out_shape=jax.ShapeDtypeStruct((Bp, 1), jnp.float32),
        grid_spec=pltpu.PrefetchScalarGridSpec(
            num_scalar_prefetch=0,
            grid=(num_chunks,),
            in_specs=[
                pl.BlockSpec((tile_T * Bp, F), lambda t: (t, 0)),   # x chunk (pipelined)
                pl.BlockSpec((F, G), lambda t: (0, 0)),             # W_ih^T (resident)
                pl.BlockSpec((H, G), lambda t: (0, 0)),             # W_hh^T (resident)
                pl.BlockSpec((1, G), lambda t: (0, 0)),             # fused bias
                pl.BlockSpec((H, 1), lambda t: (0, 0)),             # W_lin^T
                pl.BlockSpec((1, 1), lambda t: (0, 0)),             # b_lin
            ],
            out_specs=pl.BlockSpec((Bp, 1), lambda t: (0, 0)),
            scratch_shapes=[
                pltpu.VMEM((Bp, H), jnp.float32),   # h carry
                pltpu.VMEM((Bp, H), jnp.float32),   # c carry
            ],
        ),
        compiler_params=pltpu.CompilerParams(
            dimension_semantics=("arbitrary",),     # serial recurrence over time
            vmem_limit_bytes=vmem_limit,
        ),
    )(x_flat, wih_t, whh_t, b, wlin_t, blin)

    return out[:B, 0]  # drop batch padding; matches .flatten() in PyTorch


def init_params(key, num_sensors, hidden_units):
    """Deterministic init matching PyTorch LSTM/Linear shapes (uniform +/- 1/sqrt(H))."""
    H, F = hidden_units, num_sensors
    k = 1.0 / jnp.sqrt(jnp.float32(H))
    keys = jax.random.split(key, 6)
    return {
        "w_ih": jax.random.uniform(keys[0], (4 * H, F), jnp.float32, -k, k),
        "w_hh": jax.random.uniform(keys[1], (4 * H, H), jnp.float32, -k, k),
        "b_ih": jax.random.uniform(keys[2], (4 * H,), jnp.float32, -k, k),
        "b_hh": jax.random.uniform(keys[3], (4 * H,), jnp.float32, -k, k),
        "w_lin": jax.random.uniform(keys[4], (1, H), jnp.float32, -k, k),
        "b_lin": jax.random.uniform(keys[5], (1,), jnp.float32, -k, k),
    }


def _reference_forward(x, params):
    """Pure-JAX f32 reference matching PyTorch semantics."""
    w_ih, w_hh = params["w_ih"], params["w_hh"]
    b = params["b_ih"] + params["b_hh"]
    B, T, F = x.shape
    H = w_hh.shape[1]
    h = jnp.zeros((B, H), jnp.float32)
    c = jnp.zeros((B, H), jnp.float32)
    for t in range(T):
        z = x[:, t, :] @ w_ih.T + h @ w_hh.T + b
        i = jax.nn.sigmoid(z[:, :H])
        f = jax.nn.sigmoid(z[:, H:2 * H])
        g = jnp.tanh(z[:, 2 * H:3 * H])
        o = jax.nn.sigmoid(z[:, 3 * H:])
        c = f * c + i * g
        h = o * jnp.tanh(c)
    return (h @ params["w_lin"].T + params["b_lin"]).reshape(-1)


if __name__ == "__main__":
    batch, seq, num_sensors, hidden_units = 2, 12, 4, 32

    key = jax.random.PRNGKey(0)
    k_x, k_p = jax.random.split(key)
    x = jax.random.normal(k_x, (batch, seq, num_sensors), dtype=jnp.float32)
    params = init_params(k_p, num_sensors, hidden_units)

    ref = _reference_forward(x, params)

    # f32 matmuls, forced tile_t=8 -> 2 time chunks with a masked ragged last chunk
    # (exercises the grid carry + masking path); tight tolerance vs. reference.
    out_f32 = jax.block_until_ready(
        shallow_regression_lstm_forward(x, params, tile_t=8,
                                        matmul_dtype=jnp.float32))
    assert out_f32.shape == (batch,)
    assert jnp.allclose(out_f32, ref, atol=1e-5, rtol=1e-5)

    # Default path: bf16 MXU operands, auto tile size; looser tolerance vs. f32 ref.
    out_bf16 = jax.block_until_ready(shallow_regression_lstm_forward(x, params))
    assert out_bf16.shape == (batch,)
    assert jnp.allclose(out_bf16, ref, atol=5e-2, rtol=5e-2)

    print("KERNEL_OK")
</pallas_src>

<mosaic_0001>
module attributes {stable_mosaic.version = 11 : i64} {
  func.func @kernel(%arg0: i32, %arg1: memref<64x4xf32, #tpu.memory_space<vmem>>, %arg2: memref<4x128xf32, #tpu.memory_space<vmem>>, %arg3: memref<32x128xf32, #tpu.memory_space<vmem>>, %arg4: memref<1x128xf32, #tpu.memory_space<vmem>>, %arg5: memref<32x1xf32, #tpu.memory_space<vmem>>, %arg6: memref<1x1xf32, #tpu.memory_space<vmem>>, %arg7: memref<8x1xf32, #tpu.memory_space<vmem>>, %arg8: memref<8x32xf32, #tpu.memory_space<vmem>>, %arg9: memref<8x32xf32, #tpu.memory_space<vmem>>) attributes {dimension_semantics = [#tpu.dimension_semantics<arbitrary>], iteration_bounds = array<i64: 2>, scalar_prefetch = 0 : i64, scratch_operands = 2 : i64, tpu.core_type = #tpu.core_type<tc>, window_params = [{transform_indices = @transform_0, window_bounds = array<i64: 64, 4>}, {pipeline_mode = #tpu.pipeline_mode<synchronous>, transform_indices = @transform_1, window_bounds = array<i64: 4, 128>}, {pipeline_mode = #tpu.pipeline_mode<synchronous>, transform_indices = @transform_2, window_bounds = array<i64: 32, 128>}, {pipeline_mode = #tpu.pipeline_mode<synchronous>, transform_indices = @transform_3, window_bounds = array<i64: 1, 128>}, {pipeline_mode = #tpu.pipeline_mode<synchronous>, transform_indices = @transform_4, window_bounds = array<i64: 32, 1>}, {pipeline_mode = #tpu.pipeline_mode<synchronous>, transform_indices = @transform_5, window_bounds = array<i64: 1, 1>}, {pipeline_mode = #tpu.pipeline_mode<synchronous>, transform_indices = @transform_6, window_bounds = array<i64: 8, 1>}]} {
    %c0_i32 = arith.constant 0 : i32
    %0 = arith.cmpi eq, %arg0, %c0_i32 : i32
    %1 = arith.extui %0 : i1 to i32
    %c0_i32_0 = arith.constant 0 : i32
    %2 = arith.cmpi ne, %1, %c0_i32_0 : i32
    scf.if %2 {
      %cst_49 = arith.constant 0.000000e+00 : f32
      %201 = vector.broadcast %cst_49 : f32 to vector<8x32xf32>
      %c0_50 = arith.constant 0 : index
      %c0_51 = arith.constant 0 : index
      %202 = vector.load %arg8[%c0_50, %c0_51] : memref<8x32xf32, #tpu.memory_space<vmem>>, vector<8x32xf32>
      tpu.vector_store %arg8[%c0_50, %c0_51], %201 {strides = array<i32>} : memref<8x32xf32, #tpu.memory_space<vmem>>, vector<8x32xf32>,
      %cst_52 = arith.constant 0.000000e+00 : f32
      %203 = vector.broadcast %cst_52 : f32 to vector<8x32xf32>
      %c0_53 = arith.constant 0 : index
      %c0_54 = arith.constant 0 : index
      %204 = vector.load %arg9[%c0_53, %c0_54] : memref<8x32xf32, #tpu.memory_space<vmem>>, vector<8x32xf32>
      tpu.vector_store %arg9[%c0_53, %c0_54], %203 {strides = array<i32>} : memref<8x32xf32, #tpu.memory_space<vmem>>, vector<8x32xf32>,
    } else {
    }
    %c0 = arith.constant 0 : index
    %c0_1 = arith.constant 0 : index
    %3 = vector.load %arg1[%c0, %c0_1] : memref<64x4xf32, #tpu.memory_space<vmem>>, vector<64x4xf32>
    %c0_2 = arith.constant 0 : index
    %c0_3 = arith.constant 0 : index
    %4 = vector.load %arg2[%c0_2, %c0_3] : memref<4x128xf32, #tpu.memory_space<vmem>>, vector<4x128xf32>
    %cst = arith.constant dense<0.000000e+00> : vector<64x128xf32>
    %5 = tpu.matmul %3, %4, %cst {dimension_numbers = #tpu.dot_dimension_numbers<[1], [0], [0], [1], [0, 0, 1, 1], [], []>} : vector<64x4xf32>, vector<4x128xf32>, vector<64x128xf32> -> vector<64x128xf32>
    %c0_4 = arith.constant 0 : index
    %c0_5 = arith.constant 0 : index
    %6 = vector.load %arg4[%c0_4, %c0_5] : memref<1x128xf32, #tpu.memory_space<vmem>>, vector<1x128xf32>
    %7 = vector.broadcast %6 : vector<1x128xf32> to vector<64x128xf32>
    %8 = arith.addf %5, %7 : vector<64x128xf32>
    %c0_6 = arith.constant 0 : index
    %c0_7 = arith.constant 0 : index
    %9 = vector.load %arg3[%c0_6, %c0_7] : memref<32x128xf32, #tpu.memory_space<vmem>>, vector<32x128xf32>
    %c0_8 = arith.constant 0 : index
    %c0_9 = arith.constant 0 : index
    %10 = vector.load %arg8[%c0_8, %c0_9] : memref<8x32xf32, #tpu.memory_space<vmem>>, vector<8x32xf32>
    %c0_10 = arith.constant 0 : index
    %c0_11 = arith.constant 0 : index
    %11 = vector.load %arg9[%c0_10, %c0_11] : memref<8x32xf32, #tpu.memory_space<vmem>>, vector<8x32xf32>
    %12 = vector.extract_strided_slice %8 {offsets = [0, 0], sizes = [8, 128], strides = [1, 1]} : vector<64x128xf32> to vector<8x128xf32>
    %cst_12 = arith.constant dense<0.000000e+00> : vector<8x128xf32>
    %13 = tpu.matmul %10, %9, %cst_12 {dimension_numbers = #tpu.dot_dimension_numbers<[1], [0], [0], [1], [0, 0, 1, 1], [], []>} : vector<8x32xf32>, vector<32x128xf32>, vector<8x128xf32> -> vector<8x128xf32>
    %14 = arith.addf %12, %13 : vector<8x128xf32>
    %15 = arith.negf %14 : vector<8x128xf32>
    %16 = math.exp %15 : vector<8x128xf32>
    %cst_13 = arith.constant 1.000000e+00 : f32
    %17 = vector.broadcast %cst_13 : f32 to vector<8x128xf32>
    %18 = arith.addf %17, %16 : vector<8x128xf32>
    %19 = arith.divf %17, %18 : vector<8x128xf32>
    %20 = vector.extract_strided_slice %19 {offsets = [0, 0], sizes = [8, 32], strides = [1, 1]} : vector<8x128xf32> to vector<8x32xf32>
    %21 = vector.extract_strided_slice %19 {offsets = [0, 32], sizes = [8, 32], strides = [1, 1]} : vector<8x128xf32> to vector<8x32xf32>
    %22 = vector.extract_strided_slice %19 {offsets = [0, 96], sizes = [8, 32], strides = [1, 1]} : vector<8x128xf32> to vector<8x32xf32>
    %23 = vector.extract_strided_slice %14 {offsets = [0, 64], sizes = [8, 32], strides = [1, 1]} : vector<8x128xf32> to vector<8x32xf32>
    %24 = math.tanh %23 : vector<8x32xf32>
    %25 = arith.mulf %21, %11 : vector<8x32xf32>
    %26 = arith.mulf %20, %24 : vector<8x32xf32>
    %27 = arith.addf %25, %26 : vector<8x32xf32>
    %28 = math.tanh %27 : vector<8x32xf32>
    %29 = arith.mulf %22, %28 : vector<8x32xf32>
    %c8_i32 = arith.constant 8 : i32
    %30 = arith.muli %arg0, %c8_i32 : i32
    %c0_i32_14 = arith.constant 0 : i32
    %31 = arith.addi %30, %c0_i32_14 : i32
    %c12_i32 = arith.constant 12 : i32
    %32 = arith.cmpi slt, %31, %c12_i32 : i32
    %33 = arith.select %32, %29, %10 : vector<8x32xf32>
    %34 = arith.select %32, %27, %11 : vector<8x32xf32>
    %35 = vector.extract_strided_slice %8 {offsets = [8, 0], sizes = [8, 128], strides = [1, 1]} : vector<64x128xf32> to vector<8x128xf32>
    %cst_15 = arith.constant dense<0.000000e+00> : vector<8x128xf32>
    %36 = tpu.matmul %33, %9, %cst_15 {dimension_numbers = #tpu.dot_dimension_numbers<[1], [0], [0], [1], [0, 0, 1, 1], [], []>} : vector<8x32xf32>, vector<32x128xf32>, vector<8x128xf32> -> vector<8x128xf32>
    %37 = arith.addf %35, %36 : vector<8x128xf32>
    %38 = arith.negf %37 : vector<8x128xf32>
    %39 = math.exp %38 : vector<8x128xf32>
    %cst_16 = arith.constant 1.000000e+00 : f32
    %40 = vector.broadcast %cst_16 : f32 to vector<8x128xf32>
    %41 = arith.addf %40, %39 : vector<8x128xf32>
    %42 = arith.divf %40, %41 : vector<8x128xf32>
    %43 = vector.extract_strided_slice %42 {offsets = [0, 0], sizes = [8, 32], strides = [1, 1]} : vector<8x128xf32> to vector<8x32xf32>
    %44 = vector.extract_strided_slice %42 {offsets = [0, 32], sizes = [8, 32], strides = [1, 1]} : vector<8x128xf32> to vector<8x32xf32>
    %45 = vector.extract_strided_slice %42 {offsets = [0, 96], sizes = [8, 32], strides = [1, 1]} : vector<8x128xf32> to vector<8x32xf32>
    %46 = vector.extract_strided_slice %37 {offsets = [0, 64], sizes = [8, 32], strides = [1, 1]} : vector<8x128xf32> to vector<8x32xf32>
    %47 = math.tanh %46 : vector<8x32xf32>
    %48 = arith.mulf %44, %34 : vector<8x32xf32>
    %49 = arith.mulf %43, %47 : vector<8x32xf32>
    %50 = arith.addf %48, %49 : vector<8x32xf32>
    %51 = math.tanh %50 : vector<8x32xf32>
    %52 = arith.mulf %45, %51 : vector<8x32xf32>
    %c8_i32_17 = arith.constant 8 : i32
    %53 = arith.muli %arg0, %c8_i32_17 : i32
    %c1_i32 = arith.constant 1 : i32
    %54 = arith.addi %53, %c1_i32 : i32
    %c12_i32_18 = arith.constant 12 : i32
    %55 = arith.cmpi slt, %54, %c12_i32_18 : i32
    %56 = arith.select %55, %52, %33 : vector<8x32xf32>
    %57 = arith.select %55, %50, %34 : vector<8x32xf32>
    %58 = vector.extract_strided_slice %8 {offsets = [16, 0], sizes = [8, 128], strides = [1, 1]} : vector<64x128xf32> to vector<8x128xf32>
    %cst_19 = arith.constant dense<0.000000e+00> : vector<8x128xf32>
    %59 = tpu.matmul %56, %9, %cst_19 {dimension_numbers = #tpu.dot_dimension_numbers<[1], [0], [0], [1], [0, 0, 1, 1], [], []>} : vector<8x32xf32>, vector<32x128xf32>, vector<8x128xf32> -> vector<8x128xf32>
    %60 = arith.addf %58, %59 : vector<8x128xf32>
    %61 = arith.negf %60 : vector<8x128xf32>
    %62 = math.exp %61 : vector<8x128xf32>
    %cst_20 = arith.constant 1.000000e+00 : f32
    %63 = vector.broadcast %cst_20 : f32 to vector<8x128xf32>
    %64 = arith.addf %63, %62 : vector<8x128xf32>
    %65 = arith.divf %63, %64 : vector<8x128xf32>
    %66 = vector.extract_strided_slice %65 {offsets = [0, 0], sizes = [8, 32], strides = [1, 1]} : vector<8x128xf32> to vector<8x32xf32>
    %67 = vector.extract_strided_slice %65 {offsets = [0, 32], sizes = [8, 32], strides = [1, 1]} : vector<8x128xf32> to vector<8x32xf32>
    %68 = vector.extract_strided_slice %65 {offsets = [0, 96], sizes = [8, 32], strides = [1, 1]} : vector<8x128xf32> to vector<8x32xf32>
    %69 = vector.extract_strided_slice %60 {offsets = [0, 64], sizes = [8, 32], strides = [1, 1]} : vector<8x128xf32> to vector<8x32xf32>
    %70 = math.tanh %69 : vector<8x32xf32>
    %71 = arith.mulf %67, %57 : vector<8x32xf32>
    %72 = arith.mulf %66, %70 : vector<8x32xf32>
    %73 = arith.addf %71, %72 : vector<8x32xf32>
    %74 = math.tanh %73 : vector<8x32xf32>
    %75 = arith.mulf %68, %74 : vector<8x32xf32>
    %c8_i32_21 = arith.constant 8 : i32
    %76 = arith.muli %arg0, %c8_i32_21 : i32
    %c2_i32 = arith.constant 2 : i32
    %77 = arith.addi %76, %c2_i32 : i32
    %c12_i32_22 = arith.constant 12 : i32
    %78 = arith.cmpi slt, %77, %c12_i32_22 : i32
    %79 = arith.select %78, %75, %56 : vector<8x32xf32>
    %80 = arith.select %78, %73, %57 : vector<8x32xf32>
    %81 = vector.extract_strided_slice %8 {offsets = [24, 0], sizes = [8, 128], strides = [1, 1]} : vector<64x128xf32> to vector<8x128xf32>
    %cst_23 = arith.constant dense<0.000000e+00> : vector<8x128xf32>
    %82 = tpu.matmul %79, %9, %cst_23 {dimension_numbers = #tpu.dot_dimension_numbers<[1], [0], [0], [1], [0, 0, 1, 1], [], []>} : vector<8x32xf32>, vector<32x128xf32>, vector<8x128xf32> -> vector<8x128xf32>
    %83 = arith.addf %81, %82 : vector<8x128xf32>
    %84 = arith.negf %83 : vector<8x128xf32>
    %85 = math.exp %84 : vector<8x128xf32>
    %cst_24 = arith.constant 1.000000e+00 : f32
    %86 = vector.broadcast %cst_24 : f32 to vector<8x128xf32>
    %87 = arith.addf %86, %85 : vector<8x128xf32>
    %88 = arith.divf %86, %87 : vector<8x128xf32>
    %89 = vector.extract_strided_slice %88 {offsets = [0, 0], sizes = [8, 32], strides = [1, 1]} : vector<8x128xf32> to vector<8x32xf32>
    %90 = vector.extract_strided_slice %88 {offsets = [0, 32], sizes = [8, 32], strides = [1, 1]} : vector<8x128xf32> to vector<8x32xf32>
    %91 = vector.extract_strided_slice %88 {offsets = [0, 96], sizes = [8, 32], strides = [1, 1]} : vector<8x128xf32> to vector<8x32xf32>
    %92 = vector.extract_strided_slice %83 {offsets = [0, 64], sizes = [8, 32], strides = [1, 1]} : vector<8x128xf32> to vector<8x32xf32>
    %93 = math.tanh %92 : vector<8x32xf32>
    %94 = arith.mulf %90, %80 : vector<8x32xf32>
    %95 = arith.mulf %89, %93 : vector<8x32xf32>
    %96 = arith.addf %94, %95 : vector<8x32xf32>
    %97 = math.tanh %96 : vector<8x32xf32>
    %98 = arith.mulf %91, %97 : vector<8x32xf32>
    %c8_i32_25 = arith.constant 8 : i32
    %99 = arith.muli %arg0, %c8_i32_25 : i32
    %c3_i32 = arith.constant 3 : i32
    %100 = arith.addi %99, %c3_i32 : i32
    %c12_i32_26 = arith.constant 12 : i32
    %101 = arith.cmpi slt, %100, %c12_i32_26 : i32
    %102 = arith.select %101, %98, %79 : vector<8x32xf32>
    %103 = arith.select %101, %96, %80 : vector<8x32xf32>
    %104 = vector.extract_strided_slice %8 {offsets = [32, 0], sizes = [8, 128], strides = [1, 1]} : vector<64x128xf32> to vector<8x128xf32>
    %cst_27 = arith.constant dense<0.000000e+00> : vector<8x128xf32>
    %105 = tpu.matmul %102, %9, %cst_27 {dimension_numbers = #tpu.dot_dimension_numbers<[1], [0], [0], [1], [0, 0, 1, 1], [], []>} : vector<8x32xf32>, vector<32x128xf32>, vector<8x128xf32> -> vector<8x128xf32>
    %106 = arith.addf %104, %105 : vector<8x128xf32>
    %107 = arith.negf %106 : vector<8x128xf32>
    %108 = math.exp %107 : vector<8x128xf32>
    %cst_28 = arith.constant 1.000000e+00 : f32
    %109 = vector.broadcast %cst_28 : f32 to vector<8x128xf32>
    %110 = arith.addf %109, %108 : vector<8x128xf32>
    %111 = arith.divf %109, %110 : vector<8x128xf32>
    %112 = vector.extract_strided_slice %111 {offsets = [0, 0], sizes = [8, 32], strides = [1, 1]} : vector<8x128xf32> to vector<8x32xf32>
    %113 = vector.extract_strided_slice %111 {offsets = [0, 32], sizes = [8, 32], strides = [1, 1]} : vector<8x128xf32> to vector<8x32xf32>
    %114 = vector.extract_strided_slice %111 {offsets = [0, 96], sizes = [8, 32], strides = [1, 1]} : vector<8x128xf32> to vector<8x32xf32>
    %115 = vector.extract_strided_slice %106 {offsets = [0, 64], sizes = [8, 32], strides = [1, 1]} : vector<8x128xf32> to vector<8x32xf32>
    %116 = math.tanh %115 : vector<8x32xf32>
    %117 = arith.mulf %113, %103 : vector<8x32xf32>
    %118 = arith.mulf %112, %116 : vector<8x32xf32>
    %119 = arith.addf %117, %118 : vector<8x32xf32>
    %120 = math.tanh %119 : vector<8x32xf32>
    %121 = arith.mulf %114, %120 : vector<8x32xf32>
    %c8_i32_29 = arith.constant 8 : i32
    %122 = arith.muli %arg0, %c8_i32_29 : i32
    %c4_i32 = arith.constant 4 : i32
    %123 = arith.addi %122, %c4_i32 : i32
    %c12_i32_30 = arith.constant 12 : i32
    %124 = arith.cmpi slt, %123, %c12_i32_30 : i32
    %125 = arith.select %124, %121, %102 : vector<8x32xf32>
    %126 = arith.select %124, %119, %103 : vector<8x32xf32>
    %127 = vector.extract_strided_slice %8 {offsets = [40, 0], sizes = [8, 128], strides = [1, 1]} : vector<64x128xf32> to vector<8x128xf32>
    %cst_31 = arith.constant dense<0.000000e+00> : vector<8x128xf32>
    %128 = tpu.matmul %125, %9, %cst_31 {dimension_numbers = #tpu.dot_dimension_numbers<[1], [0], [0], [1], [0, 0, 1, 1], [], []>} : vector<8x32xf32>, vector<32x128xf32>, vector<8x128xf32> -> vector<8x128xf32>
    %129 = arith.addf %127, %128 : vector<8x128xf32>
    %130 = arith.negf %129 : vector<8x128xf32>
    %131 = math.exp %130 : vector<8x128xf32>
    %cst_32 = arith.constant 1.000000e+00 : f32
    %132 = vector.broadcast %cst_32 : f32 to vector<8x128xf32>
    %133 = arith.addf %132, %131 : vector<8x128xf32>
    %134 = arith.divf %132, %133 : vector<8x128xf32>
    %135 = vector.extract_strided_slice %134 {offsets = [0, 0], sizes = [8, 32], strides = [1, 1]} : vector<8x128xf32> to vector<8x32xf32>
    %136 = vector.extract_strided_slice %134 {offsets = [0, 32], sizes = [8, 32], strides = [1, 1]} : vector<8x128xf32> to vector<8x32xf32>
    %137 = vector.extract_strided_slice %134 {offsets = [0, 96], sizes = [8, 32], strides = [1, 1]} : vector<8x128xf32> to vector<8x32xf32>
    %138 = vector.extract_strided_slice %129 {offsets = [0, 64], sizes = [8, 32], strides = [1, 1]} : vector<8x128xf32> to vector<8x32xf32>
    %139 = math.tanh %138 : vector<8x32xf32>
    %140 = arith.mulf %136, %126 : vector<8x32xf32>
    %141 = arith.mulf %135, %139 : vector<8x32xf32>
    %142 = arith.addf %140, %141 : vector<8x32xf32>
    %143 = math.tanh %142 : vector<8x32xf32>
    %144 = arith.mulf %137, %143 : vector<8x32xf32>
    %c8_i32_33 = arith.constant 8 : i32
    %145 = arith.muli %arg0, %c8_i32_33 : i32
    %c5_i32 = arith.constant 5 : i32
    %146 = arith.addi %145, %c5_i32 : i32
    %c12_i32_34 = arith.constant 12 : i32
    %147 = arith.cmpi slt, %146, %c12_i32_34 : i32
    %148 = arith.select %147, %144, %125 : vector<8x32xf32>
    %149 = arith.select %147, %142, %126 : vector<8x32xf32>
    %150 = vector.extract_strided_slice %8 {offsets = [48, 0], sizes = [8, 128], strides = [1, 1]} : vector<64x128xf32> to vector<8x128xf32>
    %cst_35 = arith.constant dense<0.000000e+00> : vector<8x128xf32>
    %151 = tpu.matmul %148, %9, %cst_35 {dimension_numbers = #tpu.dot_dimension_numbers<[1], [0], [0], [1], [0, 0, 1, 1], [], []>} : vector<8x32xf32>, vector<32x128xf32>, vector<8x128xf32> -> vector<8x128xf32>
    %152 = arith.addf %150, %151 : vector<8x128xf32>
    %153 = arith.negf %152 : vector<8x128xf32>
    %154 = math.exp %153 : vector<8x128xf32>
    %cst_36 = arith.constant 1.000000e+00 : f32
    %155 = vector.broadcast %cst_36 : f32 to vector<8x128xf32>
    %156 = arith.addf %155, %154 : vector<8x128xf32>
    %157 = arith.divf %155, %156 : vector<8x128xf32>
    %158 = vector.extract_strided_slice %157 {offsets = [0, 0], sizes = [8, 32], strides = [1, 1]} : vector<8x128xf32> to vector<8x32xf32>
    %159 = vector.extract_strided_slice %157 {offsets = [0, 32], sizes = [8, 32], strides = [1, 1]} : vector<8x128xf32> to vector<8x32xf32>
    %160 = vector.extract_strided_slice %157 {offsets = [0, 96], sizes = [8, 32], strides = [1, 1]} : vector<8x128xf32> to vector<8x32xf32>
    %161 = vector.extract_strided_slice %152 {offsets = [0, 64], sizes = [8, 32], strides = [1, 1]} : vector<8x128xf32> to vector<8x32xf32>
    %162 = math.tanh %161 : vector<8x32xf32>
    %163 = arith.mulf %159, %149 : vector<8x32xf32>
    %164 = arith.mulf %158, %162 : vector<8x32xf32>
    %165 = arith.addf %163, %164 : vector<8x32xf32>
    %166 = math.tanh %165 : vector<8x32xf32>
    %167 = arith.mulf %160, %166 : vector<8x32xf32>
    %c8_i32_37 = arith.constant 8 : i32
    %168 = arith.muli %arg0, %c8_i32_37 : i32
    %c6_i32 = arith.constant 6 : i32
    %169 = arith.addi %168, %c6_i32 : i32
    %c12_i32_38 = arith.constant 12 : i32
    %170 = arith.cmpi slt, %169, %c12_i32_38 : i32
    %171 = arith.select %170, %167, %148 : vector<8x32xf32>
    %172 = arith.select %170, %165, %149 : vector<8x32xf32>
    %173 = vector.extract_strided_slice %8 {offsets = [56, 0], sizes = [8, 128], strides = [1, 1]} : vector<64x128xf32> to vector<8x128xf32>
    %cst_39 = arith.constant dense<0.000000e+00> : vector<8x128xf32>
    %174 = tpu.matmul %171, %9, %cst_39 {dimension_numbers = #tpu.dot_dimension_numbers<[1], [0], [0], [1], [0, 0, 1, 1], [], []>} : vector<8x32xf32>, vector<32x128xf32>, vector<8x128xf32> -> vector<8x128xf32>
    %175 = arith.addf %173, %174 : vector<8x128xf32>
    %176 = arith.negf %175 : vector<8x128xf32>
    %177 = math.exp %176 : vector<8x128xf32>
    %cst_40 = arith.constant 1.000000e+00 : f32
    %178 = vector.broadcast %cst_40 : f32 to vector<8x128xf32>
    %179 = arith.addf %178, %177 : vector<8x128xf32>
    %180 = arith.divf %178, %179 : vector<8x128xf32>
    %181 = vector.extract_strided_slice %180 {offsets = [0, 0], sizes = [8, 32], strides = [1, 1]} : vector<8x128xf32> to vector<8x32xf32>
    %182 = vector.extract_strided_slice %180 {offsets = [0, 32], sizes = [8, 32], strides = [1, 1]} : vector<8x128xf32> to vector<8x32xf32>
    %183 = vector.extract_strided_slice %180 {offsets = [0, 96], sizes = [8, 32], strides = [1, 1]} : vector<8x128xf32> to vector<8x32xf32>
    %184 = vector.extract_strided_slice %175 {offsets = [0, 64], sizes = [8, 32], strides = [1, 1]} : vector<8x128xf32> to vector<8x32xf32>
    %185 = math.tanh %184 : vector<8x32xf32>
    %186 = arith.mulf %182, %172 : vector<8x32xf32>
    %187 = arith.mulf %181, %185 : vector<8x32xf32>
    %188 = arith.addf %186, %187 : vector<8x32xf32>
    %189 = math.tanh %188 : vector<8x32xf32>
    %190 = arith.mulf %183, %189 : vector<8x32xf32>
    %c8_i32_41 = arith.constant 8 : i32
    %191 = arith.muli %arg0, %c8_i32_41 : i32
    %c7_i32 = arith.constant 7 : i32
    %192 = arith.addi %191, %c7_i32 : i32
    %c12_i32_42 = arith.constant 12 : i32
    %193 = arith.cmpi slt, %192, %c12_i32_42 : i32
    %194 = arith.select %193, %190, %171 : vector<8x32xf32>
    %195 = arith.select %193, %188, %172 : vector<8x32xf32>
    %c0_43 = arith.constant 0 : index
    %c0_44 = arith.constant 0 : index
    %196 = vector.load %arg8[%c0_43, %c0_44] : memref<8x32xf32, #tpu.memory_space<vmem>>, vector<8x32xf32>
    tpu.vector_store %arg8[%c0_43, %c0_44], %194 {strides = array<i32>} : memref<8x32xf32, #tpu.memory_space<vmem>>, vector<8x32xf32>,
    %c0_45 = arith.constant 0 : index
    %c0_46 = arith.constant 0 : index
    %197 = vector.load %arg9[%c0_45, %c0_46] : memref<8x32xf32, #tpu.memory_space<vmem>>, vector<8x32xf32>
    tpu.vector_store %arg9[%c0_45, %c0_46], %195 {strides = array<i32>} : memref<8x32xf32, #tpu.memory_space<vmem>>, vector<8x32xf32>,
    %c1_i32_47 = arith.constant 1 : i32
    %198 = arith.cmpi eq, %arg0, %c1_i32_47 : i32
    %199 = arith.extui %198 : i1 to i32
    %c0_i32_48 = arith.constant 0 : i32
    %200 = arith.cmpi ne, %199, %c0_i32_48 : i32
    scf.if %200 {
      %c0_49 = arith.constant 0 : index
      %c0_50 = arith.constant 0 : index
      %201 = vector.load %arg8[%c0_49, %c0_50] : memref<8x32xf32, #tpu.memory_space<vmem>>, vector<8x32xf32>
      %c0_51 = arith.constant 0 : index
      %c0_52 = arith.constant 0 : index
      %202 = vector.load %arg5[%c0_51, %c0_52] : memref<32x1xf32, #tpu.memory_space<vmem>>, vector<32x1xf32>
      %cst_53 = arith.constant dense<0.000000e+00> : vector<8x1xf32>
      %203 = tpu.matmul %201, %202, %cst_53 {dimension_numbers = #tpu.dot_dimension_numbers<[1], [0], [0], [1], [0, 0, 1, 1], [], []>} : vector<8x32xf32>, vector<32x1xf32>, vector<8x1xf32> -> vector<8x1xf32>
      %c0_54 = arith.constant 0 : index
      %c0_55 = arith.constant 0 : index
      %204 = vector.load %arg6[%c0_54, %c0_55] : memref<1x1xf32, #tpu.memory_space<vmem>>, vector<1x1xf32>
      %205 = vector.broadcast %204 : vector<1x1xf32> to vector<8x1xf32>
      %206 = arith.addf %203, %205 : vector<8x1xf32>
      %c0_56 = arith.constant 0 : index
      %c0_57 = arith.constant 0 : index
      %207 = vector.load %arg7[%c0_56, %c0_57] : memref<8x1xf32, #tpu.memory_space<vmem>>, vector<8x1xf32>
      tpu.vector_store %arg7[%c0_56, %c0_57], %206 {strides = array<i32>} : memref<8x1xf32, #tpu.memory_space<vmem>>, vector<8x1xf32>,
    } else {
    }
    return
  }
  func.func @transform_0(%arg0: i32) -> (i32, i32) {
    %c0_i32 = arith.constant 0 : i32
    %c0_i32_0 = arith.constant 0 : i32
    return %arg0, %c0_i32 : i32, i32
  }
  func.func @transform_1(%arg0: i32) -> (i32, i32) {
    %c0_i32 = arith.constant 0 : i32
    %c0_i32_0 = arith.constant 0 : i32
    %c0_i32_1 = arith.constant 0 : i32
    return %c0_i32, %c0_i32_0 : i32, i32
  }
  func.func @transform_2(%arg0: i32) -> (i32, i32) {
    %c0_i32 = arith.constant 0 : i32
    %c0_i32_0 = arith.constant 0 : i32
    %c0_i32_1 = arith.constant 0 : i32
    return %c0_i32, %c0_i32_0 : i32, i32
  }
  func.func @transform_3(%arg0: i32) -> (i32, i32) {
    %c0_i32 = arith.constant 0 : i32
    %c0_i32_0 = arith.constant 0 : i32
    %c0_i32_1 = arith.constant 0 : i32
    return %c0_i32, %c0_i32_0 : i32, i32
  }
  func.func @transform_4(%arg0: i32) -> (i32, i32) {
    %c0_i32 = arith.constant 0 : i32
    %c0_i32_0 = arith.constant 0 : i32
    %c0_i32_1 = arith.constant 0 : i32
    return %c0_i32, %c0_i32_0 : i32, i32
  }
  func.func @transform_5(%arg0: i32) -> (i32, i32) {
    %c0_i32 = arith.constant 0 : i32
    %c0_i32_0 = arith.constant 0 : i32
    %c0_i32_1 = arith.constant 0 : i32
    return %c0_i32, %c0_i32_0 : i32, i32
  }
  func.func @transform_6(%arg0: i32) -> (i32, i32) {
    %c0_i32 = arith.constant 0 : i32
    %c0_i32_0 = arith.constant 0 : i32
    %c0_i32_1 = arith.constant 0 : i32
    return %c0_i32, %c0_i32_0 : i32, i32
  }
}

</mosaic_0001>

<llo_original>
// kernel: tpu_custom_call.1
$region0: #{tpu_custom_call.1}
  #allocation0 [shape = 'u32[]', space=smem, size = 0x4, offset = 0x4, fixed_abs, tag = 'smem constant byte address 0x4 - core index']
  #allocation1 [shape = 'u32[144,128]{1,0:T(1,128)}', space=vmem, size = 0x12000, scoped, tag = 'internal scratch']
  #allocation2 [shape = 'f32[8,32]{1,0:T(8,128)}', space=vmem, size = 0x1000, scoped, tag = 'scratch operand']
  #allocation3 [shape = 'f32[8,32]{1,0:T(8,128)}', space=vmem, size = 0x1000, scoped, tag = 'scratch operand']
  #allocation4 [shape = 'f32[1,1]{1,0:T(1,128)S(1)}', space=vmem, size = 0x200, scoped, tag = 'scoped memory for tpu_custom_call.1']
  %s0 = inlined_call_operand.vmem [shape: f32[96,4], index: 0, kind: input, shape index: {}]
  %s1 = inlined_call_operand.vmem [shape: f32[4,128], index: 1, kind: input, shape index: {}]
  %s2 = inlined_call_operand.vmem [shape: f32[32,128], index: 2, kind: input, shape index: {}]
  %s3 = inlined_call_operand.vmem [shape: f32[1,128], index: 3, kind: input, shape index: {}]
  %s4 = inlined_call_operand.vmem [shape: f32[32,1], index: 4, kind: input, shape index: {}]
  %s5 = inlined_call_operand.<no memory space> [shape: f32[1,1], index: 5, kind: input, shape index: {}]
  %s6 = inlined_call_operand.vmem [shape: f32[8,1], index: 6, kind: output, shape index: {}]
  %s7 = sld [smem:[#allocation0]]
  $region65: #{tpu_custom_call.1} parent=0
    _
  %s9 = ssub.s32 1, %s7
  %s10 = scalar_select 0, %s9, %s7
  %v11 = vstv %s5
  %12 = vst [vmem:[#allocation4] sm:$0x1] %v11
  loop: start=0, step=1, limit=4
  $region2: #{tpu_custom_call.1} parent=0 // loop_pre_header
    _
  $region3: #{tpu_custom_call.1} parent=0 // loop_header
    %s14 = sphi 0, %s18
    %p15 = scmp.ge.s32.totalorder %s14, 4
    %s24 = sphi 0, %s26
    %s27 = sphi 0, %s24
    %s28 = sphi 0, %s27
    %s44 = sphi 0, %s28
    %s48 = sphi 0, %s48
    %s50 = sphi 0, %s48
    %s51 = sphi 0, %s50
    %s65 = sphi 0, %s51
    %s69 = sphi 0, %s69
    %s71 = sphi 0, %s69
    %s72 = sphi 0, %s71
    %s86 = sphi 0, %s72
    %s90 = sphi 0, %s90
    %s92 = sphi 0, %s90
    %s93 = sphi 0, %s92
    %s107 = sphi 0, %s93
    %s111 = sphi 0, %s111
    %s113 = sphi 0, %s111
    %s114 = sphi 0, %s113
    %s128 = sphi 0, %s114
    %s132 = sphi 0, %s132
    %s134 = sphi 0, %s132
    %s135 = sphi 0, %s134
    %s149 = sphi 0, %s135
    %s153 = sphi 0, %s153
    %s155 = sphi 0, %s153
    %s156 = sphi 0, %s155
    %s170 = sphi 0, %s156
  $region4: #{tpu_custom_call.1} parent=0 // loop_header_branch
    %17 = sbr.rel (%p15) target = $region8
  $region5: #{tpu_custom_call.1} parent=0 // loop_body
    %s19 = ssub.s32 %s14, 1
    %s20 = ssub.s32 %s14, 2
    %s21 = sadd.s32 %s14, 1
    %s22 = ssub.s32 %s14, %s21
    %p23 = scmp.eq.s32.totalorder %s22, 0
    %s25 = sadd.s32 %s24, 1
    %s26 = scalar_select %p23, %s24, %s25
    %p29 = pneg %p23
    %p30 = scmp.eq.s32.totalorder %s14, 1
    %p31 = por %p29, %p30
    %p32 = scmp.ne.s32.totalorder %s24, %s27
    %p33 = scmp.eq.s32.totalorder %s14, 0
    %p34 = por %p32, %p33
    %p35 = scmp.ne.s32.totalorder %s24, %s27
    %p36 = scmp.eq.s32.totalorder %s19, 1
    %p37 = por %p35, %p36
    %p38 = scmp.ne.s32.totalorder %s27, %s28
    %p39 = scmp.eq.s32.totalorder %s19, 0
    %p40 = por %p38, %p39
    %p41 = scmp.ne.s32.totalorder %s27, %s28
    %p42 = scmp.eq.s32.totalorder %s20, 1
    %p43 = por %p41, %p42
    %p45 = scmp.ne.s32.totalorder %s28, %s44
    %p46 = scmp.eq.s32.totalorder %s20, 0
    %p47 = por %p45, %p46
    %s49 = sadd.s32 %s48, 1
    %p52 = scmp.eq.s32.totalorder %s14, 1
    %p53 = scmp.ne.s32.totalorder %s48, %s50
    %p54 = scmp.eq.s32.totalorder %s14, 0
    %p55 = por %p53, %p54
    %p56 = scmp.ne.s32.totalorder %s48, %s50
    %p57 = scmp.eq.s32.totalorder %s19, 1
    %p58 = por %p56, %p57
    %p59 = scmp.ne.s32.totalorder %s50, %s51
    %p60 = scmp.eq.s32.totalorder %s19, 0
    %p61 = por %p59, %p60
    %p62 = scmp.ne.s32.totalorder %s50, %s51
    %p63 = scmp.eq.s32.totalorder %s20, 1
    %p64 = por %p62, %p63
    %p66 = scmp.ne.s32.totalorder %s51, %s65
    %p67 = scmp.eq.s32.totalorder %s20, 0
    %p68 = por %p66, %p67
    %s70 = sadd.s32 %s69, 1
    %p73 = scmp.eq.s32.totalorder %s14, 1
    %p74 = scmp.ne.s32.totalorder %s69, %s71
    %p75 = scmp.eq.s32.totalorder %s14, 0
    %p76 = por %p74, %p75
    %p77 = scmp.ne.s32.totalorder %s69, %s71
    %p78 = scmp.eq.s32.totalorder %s19, 1
    %p79 = por %p77, %p78
    %p80 = scmp.ne.s32.totalorder %s71, %s72
    %p81 = scmp.eq.s32.totalorder %s19, 0
    %p82 = por %p80, %p81
    %p83 = scmp.ne.s32.totalorder %s71, %s72
    %p84 = scmp.eq.s32.totalorder %s20, 1
    %p85 = por %p83, %p84
    %p87 = scmp.ne.s32.totalorder %s72, %s86
    %p88 = scmp.eq.s32.totalorder %s20, 0
    %p89 = por %p87, %p88
    %s91 = sadd.s32 %s90, 1
    %p94 = scmp.eq.s32.totalorder %s14, 1
    %p95 = scmp.ne.s32.totalorder %s90, %s92
    %p96 = scmp.eq.s32.totalorder %s14, 0
    %p97 = por %p95, %p96
    %p98 = scmp.ne.s32.totalorder %s90, %s92
    %p99 = scmp.eq.s32.totalorder %s19, 1
    %p100 = por %p98, %p99
    %p101 = scmp.ne.s32.totalorder %s92, %s93
    %p102 = scmp.eq.s32.totalorder %s19, 0
    %p103 = por %p101, %p102
    %p104 = scmp.ne.s32.totalorder %s92, %s93
    %p105 = scmp.eq.s32.totalorder %s20, 1
    %p106 = por %p104, %p105
    %p108 = scmp.ne.s32.totalorder %s93, %s107
    %p109 = scmp.eq.s32.totalorder %s20, 0
    %p110 = por %p108, %p109
    %s112 = sadd.s32 %s111, 1
    %p115 = scmp.eq.s32.totalorder %s14, 1
    %p116 = scmp.ne.s32.totalorder %s111, %s113
    %p117 = scmp.eq.s32.totalorder %s14, 0
    %p118 = por %p116, %p117
    %p119 = scmp.ne.s32.totalorder %s111, %s113
    %p120 = scmp.eq.s32.totalorder %s19, 1
    %p121 = por %p119, %p120
    %p122 = scmp.ne.s32.totalorder %s113, %s114
    %p123 = scmp.eq.s32.totalorder %s19, 0
    %p124 = por %p122, %p123
    %p125 = scmp.ne.s32.totalorder %s113, %s114
    %p126 = scmp.eq.s32.totalorder %s20, 1
    %p127 = por %p125, %p126
    %p129 = scmp.ne.s32.totalorder %s114, %s128
    %p130 = scmp.eq.s32.totalorder %s20, 0
    %p131 = por %p129, %p130
    %s133 = sadd.s32 %s132, 1
    %p136 = scmp.eq.s32.totalorder %s14, 1
    %p137 = scmp.ne.s32.totalorder %s132, %s134
    %p138 = scmp.eq.s32.totalorder %s14, 0
    %p139 = por %p137, %p138
    %p140 = scmp.ne.s32.totalorder %s132, %s134
    %p141 = scmp.eq.s32.totalorder %s19, 1
    %p142 = por %p140, %p141
    %p143 = scmp.ne.s32.totalorder %s134, %s135
    %p144 = scmp.eq.s32.totalorder %s19, 0
    %p145 = por %p143, %p144
    %p146 = scmp.ne.s32.totalorder %s134, %s135
    %p147 = scmp.eq.s32.totalorder %s20, 1
    %p148 = por %p146, %p147
    %p150 = scmp.ne.s32.totalorder %s135, %s149
    %p151 = scmp.eq.s32.totalorder %s20, 0
    %p152 = por %p150, %p151
    %s154 = sadd.s32 %s153, 1
    %p157 = scmp.eq.s32.totalorder %s14, 1
    %p158 = scmp.ne.s32.totalorder %s153, %s155
    %p159 = scmp.eq.s32.totalorder %s14, 0
    %p160 = por %p158, %p159
    %p161 = scmp.ne.s32.totalorder %s153, %s155
    %p162 = scmp.eq.s32.totalorder %s19, 1
    %p163 = por %p161, %p162
    %p164 = scmp.ne.s32.totalorder %s155, %s156
    %p165 = scmp.eq.s32.totalorder %s19, 0
    %p166 = por %p164, %p165
    %p167 = scmp.ne.s32.totalorder %s155, %s156
    %p168 = scmp.eq.s32.totalorder %s20, 1
    %p169 = por %p167, %p168
    %p171 = scmp.ne.s32.totalorder %s156, %s170
    %p172 = scmp.eq.s32.totalorder %s20, 0
    %p173 = por %p171, %p172
    %p174 = scmp.le.s32.totalorder 1, %s14
    %p175 = scmp.lt.s32.totalorder %s14, 3
    %p176 = pnand %p174, %p175
    %p177 = pneg %p176
    // Predicated region
    $region9: #{tpu_custom_call.1} parent=5 // pred_check
      _
    $region10: #{tpu_custom_call.1} parent=5 // pred_check_branch
      %179 = sbr.rel (%p176) target = $region12
    $region11: #{tpu_custom_call.1} parent=5 // pred_region
      %s180 = ssub.s32 %s14, 1
      // Predicated region
      $region13: #{tpu_custom_call.1} parent=11 // pred_check
        %p181 = pneg %p61
      $region14: #{tpu_custom_call.1} parent=11 // pred_check_branch
        %183 = sbr.rel (%p181) target = $region16
      $region15: #{tpu_custom_call.1} parent=11 // pred_region
        _
      $region16: #{tpu_custom_call.1} parent=11 // pred_fallthru
        _
      // Predicated region
      $region17: #{tpu_custom_call.1} parent=11 // pred_check
        %p184 = pneg %p82
      $region18: #{tpu_custom_call.1} parent=11 // pred_check_branch
        %186 = sbr.rel (%p184) target = $region20
      $region19: #{tpu_custom_call.1} parent=11 // pred_region
        _
      $region20: #{tpu_custom_call.1} parent=11 // pred_fallthru
        _
      // Predicated region
      $region21: #{tpu_custom_call.1} parent=11 // pred_check
        %p187 = pneg %p103
      $region22: #{tpu_custom_call.1} parent=11 // pred_check_branch
        %189 = sbr.rel (%p187) target = $region24
      $region23: #{tpu_custom_call.1} parent=11 // pred_region
        _
      $region24: #{tpu_custom_call.1} parent=11 // pred_fallthru
        _
      // Predicated region
      $region25: #{tpu_custom_call.1} parent=11 // pred_check
        %p190 = pneg %p124
      $region26: #{tpu_custom_call.1} parent=11 // pred_check_branch
        %192 = sbr.rel (%p190) target = $region28
      $region27: #{tpu_custom_call.1} parent=11 // pred_region
        _
      $region28: #{tpu_custom_call.1} parent=11 // pred_fallthru
        _
      // Predicated region
      $region29: #{tpu_custom_call.1} parent=11 // pred_check
        %p193 = pneg %p145
      $region30: #{tpu_custom_call.1} parent=11 // pred_check_branch
        %195 = sbr.rel (%p193) target = $region32
      $region31: #{tpu_custom_call.1} parent=11 // pred_region
        _
      $region32: #{tpu_custom_call.1} parent=11 // pred_fallthru
        _
    $region12: #{tpu_custom_call.1} parent=5 // pred_fallthru
      _
    %p196 = scmp.lt.s32.totalorder %s14, 2
    // Predicated region
    $region33: #{tpu_custom_call.1} parent=5 // pred_check
      %p197 = pneg %p196
    $region34: #{tpu_custom_call.1} parent=5 // pred_check_branch
      %199 = sbr.rel (%p197) target = $region36
    $region35: #{tpu_custom_call.1} parent=5 // pred_region
      // Predicated region
      $region37: #{tpu_custom_call.1} parent=35 // pred_check
        %p200 = pneg %p34
      $region38: #{tpu_custom_call.1} parent=35 // pred_check_branch
        %202 = sbr.rel (%p200) target = $region40
      $region39: #{tpu_custom_call.1} parent=35 // pred_region
        %s203 = smul.u32 8, %s14
        %s204 = ssub.s32 12, %s203
        %p205 = scmp.lt.s32.totalorder %s204, 8
        %s206 = scalar_select %p205, %s204, 8
        %s207 = smul.u32 128, %s206
        %p208 = scmp.lt.s32.totalorder %s203, 11
        %s209 = scalar_select %p208, %s203, 11
        %s210 = smul.addr %s209, 8
        %s211 = scalar_lea.vmem %s0, %s210
        %s212 = smul.u32 8, %s14
        %s213 = ssub.s32 12, %s212
        %p214 = scmp.lt.s32.totalorder %s213, 8
        %s215 = scalar_select %p214, %s213, 8
        %s216 = smul.u32 128, %s215
      $region40: #{tpu_custom_call.1} parent=35 // pred_fallthru
        _
    $region36: #{tpu_custom_call.1} parent=5 // pred_fallthru
      _
    %p217 = scmp.le.s32.totalorder 1, %s14
    %p218 = scmp.lt.s32.totalorder %s14, 3
    %p219 = pnand %p217, %p218
    %p220 = pneg %p219
    // Predicated region
    $region41: #{tpu_custom_call.1} parent=5 // pred_check
      _
    $region42: #{tpu_custom_call.1} parent=5 // pred_check_branch
      %222 = sbr.rel (%p219) target = $region44
    $region43: #{tpu_custom_call.1} parent=5 // pred_region
      %s223 = ssub.s32 %s14, 1
      %s224 = smul.u32 8, %s19
      %s225 = ssub.s32 12, %s224
      %p226 = scmp.lt.s32.totalorder %s225, 8
      %s227 = scalar_select %p226, %s225, 8
      %s228 = smul.u32 128, %s227
      %p229 = scmp.lt.s32.totalorder %s224, 11
      %s230 = scalar_select %p229, %s224, 11
      %s231 = smul.addr %s230, 8
      %s232 = scalar_lea.vmem %s0, %s231
      %p233 = pneg %p40
      %p234 = pneg %p37
      %p235 = pneg %p61
      %p236 = pneg %p58
      %p237 = pneg %p82
      %p238 = pneg %p79
      %p239 = pneg %p103
      %p240 = pneg %p100
      %p241 = pneg %p124
      %p242 = pneg %p121
      %p243 = pneg %p145
      %p244 = pneg %p142
      %p245 = pneg %p166
      %p246 = pneg %p163
      %s247 = smul.u32 8, %s19
      %s248 = ssub.s32 12, %s247
      %p249 = scmp.lt.s32.totalorder %s248, 8
      %s250 = scalar_select %p249, %s248, 8
      %s251 = smul.u32 128, %s250
      %p252 = scmp.lt.s32.totalorder %s247, 11
      %s253 = scalar_select %p252, %s247, 11
      %s254 = smul.addr %s253, 8
      %s255 = scalar_lea.vmem %s0, %s254
      %s256 = smul.u32 8, %s19
      %s257 = ssub.s32 12, %s256
      %p258 = scmp.lt.s32.totalorder %s257, 8
      %s259 = scalar_select %p258, %s257, 8
      %s260 = smul.u32 128, %s259
      %p261 = scmp.eq.s32.totalorder %s19, 0
      // Predicated region
      $region45: #{tpu_custom_call.1} parent=43 // pred_check
        %p262 = pneg %p261
      $region46: #{tpu_custom_call.1} parent=43 // pred_check_branch
        %264 = sbr.rel (%p262) target = $region48
      $region47: #{tpu_custom_call.1} parent=43 // pred_region
        %vm265 = vcmask 261120
        %266 = vst.msk [vmem:[#allocation2] sm:$0xff] %vm265, 0.0
        %267 = vst.msk [vmem:[#allocation3] sm:$0xff] %vm265, 0.0
      $region48: #{tpu_custom_call.1} parent=43 // pred_fallthru
        _
      %v268 = vld [vmem:[%s255] sm:$0xff]
      %v269 = vld [vmem:[%s255 + $0x8] sm:$0xff]
      %v270 = vld [vmem:[%s255 + $0x10] sm:$0xff]
      %v271 = vld [vmem:[%s255 + $0x18] sm:$0xff]
      %v272 = vld [vmem:[%s255 + $0x20] sm:$0xff]
      %v273 = vld [vmem:[%s255 + $0x28] sm:$0xff]
      %v274 = vld [vmem:[%s255 + $0x30] sm:$0xff]
      %v275 = vld [vmem:[%s255 + $0x38] sm:$0xff]
      %v276 = vld [vmem:[%s1] sm:$0xf]
      %v277 = vld [vmem:[%s3] sm:$0x1]
      %v279 = vlaneseq
      %v280 = vshrl.u32 %v279, 7
      %v281 = vsub.s32 0, %v280
      %v282 = vrot.slane %v277, %v281
      %vm284 = vcmask 31744
      %v286 = vsel %vm284, %v268, 0
      %v289 = vsel %vm284, %v269, 0
      %v292 = vsel %vm284, %v270, 0
      %v295 = vsel %vm284, %v271, 0
      %v298 = vsel %vm284, %v272, 0
      %v301 = vsel %vm284, %v273, 0
      %v304 = vsel %vm284, %v274, 0
      %v307 = vsel %vm284, %v275, 0
      %vm309 = vcmask 1043456
      %v311 = vsel %vm309, %v276, 0
      %313 = vmatprep.subr.mxu0 0.0
      %314 = vmatpush1.msra.mxu0 %v311
      %315 = vmatprep.subr.mxu0 0.0
      %316 = vmatpush1.msra.mxu0 0.0
      %317 = vmatprep.subr.mxu0 0.0
      %318 = vmatpush1.msra.mxu0 0.0
      %319 = vmatprep.subr.mxu0 0.0
      %320 = vmatpush1.msra.mxu0 0.0
      %321 = vmatprep.subr.mxu0 0.0
      %322 = vmatpush1.msra.mxu0 0.0
      %323 = vmatprep.subr.mxu0 0.0
      %324 = vmatpush1.msra.mxu0 0.0
      %325 = vmatprep.subr.mxu0 0.0
      %326 = vmatpush1.msra.mxu0 0.0
      %327 = vmatprep.subr.mxu0 0.0
      %328 = vmatpush1.msra.mxu0 0.0
      %329 = vmatprep.subr.mxu0 0.0
      %330 = vmatpush1.msra.mxu0 0.0
      %331 = vmatprep.subr.mxu0 0.0
      %332 = vmatpush1.msra.mxu0 0.0
      %333 = vmatprep.subr.mxu0 0.0
      %334 = vmatpush1.msra.mxu0 0.0
      %335 = vmatprep.subr.mxu0 0.0
      %336 = vmatpush1.msra.mxu0 0.0
      %337 = vmatprep.subr.mxu0 0.0
      %338 = vmatpush1.msra.mxu0 0.0
      %339 = vmatprep.subr.mxu0 0.0
      %340 = vmatpush1.msra.mxu0 0.0
      %341 = vmatprep.subr.mxu0 0.0
      %342 = vmatpush1.msra.mxu0 0.0
      %343 = vmatprep.subr.mxu0 0.0
      %344 = vmatpush1.msra.mxu0 0.0
      %345 = vmatprep.subr.mxu0 0.0
      %346 = vmatpush1.msra.mxu0 0.0
      %347 = vmatprep.subr.mxu0 0.0
      %348 = vmatpush1.msra.mxu0 0.0
      %349 = vmatprep.subr.mxu0 0.0
      %350 = vmatpush1.msra.mxu0 0.0
      %351 = vmatprep.subr.mxu0 0.0
      %352 = vmatpush1.msra.mxu0 0.0
      %353 = vmatprep.subr.mxu0 0.0
      %354 = vmatpush1.msra.mxu0 0.0
      %355 = vmatprep.subr.mxu0 0.0
      %356 = vmatpush1.msra.mxu0 0.0
      %357 = vmatprep.subr.mxu0 0.0
      %358 = vmatpush1.msra.mxu0 0.0
      %359 = vmatprep.subr.mxu0 0.0
      %360 = vmatpush1.msra.mxu0 0.0
      %361 = vmatprep.subr.mxu0 0.0
      %362 = vmatpush1.msra.mxu0 0.0
      %363 = vmatprep.subr.mxu0 0.0
      %364 = vmatpush1.msra.mxu0 0.0
      %365 = vmatprep.subr.mxu0 0.0
      %366 = vmatpush1.msra.mxu0 0.0
      %367 = vmatprep.subr.mxu0 0.0
      %368 = vmatpush1.msra.mxu0 0.0
      %369 = vmatprep.subr.mxu0 0.0
      %370 = vmatpush1.msra.mxu0 0.0
      %371 = vmatprep.subr.mxu0 0.0
      %372 = vmatpush1.msra.mxu0 0.0
      %373 = vmatprep.subr.mxu0 0.0
      %374 = vmatpush1.msra.mxu0 0.0
      %375 = vmatprep.subr.mxu0 0.0
      %376 = vmatpush1.msra.mxu0 0.0
      %377 = vmatprep.mubr.f32.mxu0 0.0
      %378 = vmatmul.mubr.f32.gmra.mrb[0].mxu0 %v286
      %v379 = vpop.f32.mrb[0].mxu0
      %v380 = vadd.f32 %v282, %v379
      %v381 = vpop.f32.mrb[0].mxu0
      %382 = vmatprep.mubr.f32.mxu0 0.0
      %383 = vmatmul.mubr.f32.gmra.mrb[0].mxu0 %v289
      %v384 = vpop.f32.mrb[0].mxu0
      %v385 = vadd.f32 %v282, %v384
      %v386 = vpop.f32.mrb[0].mxu0
      %387 = vmatprep.mubr.f32.mxu0 0.0
      %388 = vmatmul.mubr.f32.gmra.mrb[0].mxu0 %v292
      %v389 = vpop.f32.mrb[0].mxu0
      %v390 = vadd.f32 %v282, %v389
      %v391 = vpop.f32.mrb[0].mxu0
      %392 = vmatprep.mubr.f32.mxu0 0.0
      %393 = vmatmul.mubr.f32.gmra.mrb[0].mxu0 %v295
      %v394 = vpop.f32.mrb[0].mxu0
      %v395 = vadd.f32 %v282, %v394
      %v396 = vpop.f32.mrb[0].mxu0
      %397 = vmatprep.mubr.f32.mxu0 0.0
      %398 = vmatmul.mubr.f32.gmra.mrb[0].mxu0 %v298
      %v399 = vpop.f32.mrb[0].mxu0
      %v400 = vadd.f32 %v282, %v399
      %v401 = vpop.f32.mrb[0].mxu0
      %402 = vmatprep.mubr.f32.mxu0 0.0
      %403 = vmatmul.mubr.f32.gmra.mrb[0].mxu0 %v301
      %v404 = vpop.f32.mrb[0].mxu0
      %v405 = vadd.f32 %v282, %v404
      %v406 = vpop.f32.mrb[0].mxu0
      %407 = vmatprep.mubr.f32.mxu0 0.0
      %408 = vmatmul.mubr.f32.gmra.mrb[0].mxu0 %v304
      %v409 = vpop.f32.mrb[0].mxu0
      %v410 = vadd.f32 %v282, %v409
      %v411 = vpop.f32.mrb[0].mxu0
      %412 = vmatprep.mubr.f32.mxu0 0.0
      %413 = vmatmul.mubr.f32.gmra.mrb[0].mxu0 %v307
      %v414 = vpop.f32.mrb[0].mxu0
      %v415 = vadd.f32 %v282, %v414
      %v416 = vpop.f32.mrb[0].mxu0
      %417 = vdwg.mxu0
      %v418 = vld [vmem:[%s2] sm:$0xff]
      %v419 = vld [vmem:[%s2 + $0x8] sm:$0xff]
      %v420 = vld [vmem:[%s2 + $0x10] sm:$0xff]
      %v421 = vld [vmem:[%s2 + $0x18] sm:$0xff]
      %v422 = vld [vmem:[#allocation2] sm:$0xff]
      %v423 = vld [vmem:[#allocation3] sm:$0xff]
      %vm424 = vcmask 261120
      %v426 = vsel %vm424, %v422, 0
      %428 = vmatprep.subr.mxu0 0.0
      %429 = vmatpush1.msra.mxu0 %v418
      %430 = vmatprep.subr.mxu0 0.0
      %431 = vmatpush1.msra.mxu0 %v419
      %432 = vmatprep.subr.mxu0 0.0
      %433 = vmatpush1.msra.mxu0 %v420
      %434 = vmatprep.subr.mxu0 0.0
      %435 = vmatpush1.msra.mxu0 %v421
      %436 = vmatprep.subr.mxu0 0.0
      %437 = vmatpush1.msra.mxu0 0.0
      %438 = vmatprep.subr.mxu0 0.0
      %439 = vmatpush1.msra.mxu0 0.0
      %440 = vmatprep.subr.mxu0 0.0
      %441 = vmatpush1.msra.mxu0 0.0
      %442 = vmatprep.subr.mxu0 0.0
      %443 = vmatpush1.msra.mxu0 0.0
      %444 = vmatprep.subr.mxu0 0.0
      %445 = vmatpush1.msra.mxu0 0.0
      %446 = vmatprep.subr.mxu0 0.0
      %447 = vmatpush1.msra.mxu0 0.0
      %448 = vmatprep.subr.mxu0 0.0
      %449 = vmatpush1.msra.mxu0 0.0
      %450 = vmatprep.subr.mxu0 0.0
      %451 = vmatpush1.msra.mxu0 0.0
      %452 = vmatprep.subr.mxu0 0.0
      %453 = vmatpush1.msra.mxu0 0.0
      %454 = vmatprep.subr.mxu0 0.0
      %455 = vmatpush1.msra.mxu0 0.0
      %456 = vmatprep.subr.mxu0 0.0
      %457 = vmatpush1.msra.mxu0 0.0
      %458 = vmatprep.subr.mxu0 0.0
      %459 = vmatpush1.msra.mxu0 0.0
      %460 = vmatprep.subr.mxu0 0.0
      %461 = vmatpush1.msra.mxu0 0.0
      %462 = vmatprep.subr.mxu0 0.0
      %463 = vmatpush1.msra.mxu0 0.0
      %464 = vmatprep.subr.mxu0 0.0
      %465 = vmatpush1.msra.mxu0 0.0
      %466 = vmatprep.subr.mxu0 0.0
      %467 = vmatpush1.msra.mxu0 0.0
      %468 = vmatprep.subr.mxu0 0.0
      %469 = vmatpush1.msra.mxu0 0.0
      %470 = vmatprep.subr.mxu0 0.0
      %471 = vmatpush1.msra.mxu0 0.0
      %472 = vmatprep.subr.mxu0 0.0
      %473 = vmatpush1.msra.mxu0 0.0
      %474 = vmatprep.subr.mxu0 0.0
      %475 = vmatpush1.msra.mxu0 0.0
      %476 = vmatprep.subr.mxu0 0.0
      %477 = vmatpush1.msra.mxu0 0.0
      %478 = vmatprep.subr.mxu0 0.0
      %479 = vmatpush1.msra.mxu0 0.0
      %480 = vmatprep.subr.mxu0 0.0
      %481 = vmatpush1.msra.mxu0 0.0
      %482 = vmatprep.subr.mxu0 0.0
      %483 = vmatpush1.msra.mxu0 0.0
      %484 = vmatprep.subr.mxu0 0.0
      %485 = vmatpush1.msra.mxu0 0.0
      %486 = vmatprep.subr.mxu0 0.0
      %487 = vmatpush1.msra.mxu0 0.0
      %488 = vmatprep.subr.mxu0 0.0
      %489 = vmatpush1.msra.mxu0 0.0
      %490 = vmatprep.subr.mxu0 0.0
      %491 = vmatpush1.msra.mxu0 0.0
      %492 = vmatprep.mubr.f32.mxu0 0.0
      %493 = vmatmul.mubr.f32.gmra.mrb[0].mxu0 %v426
      %v494 = vpop.f32.mrb[0].mxu0
      %v495 = vadd.f32 0.0, %v494
      %v496 = vpop.f32.mrb[0].mxu0
      %497 = vdwg.mxu0
      %v498 = vadd.f32 %v380, %v495
      %v499 = vxor.u32 %v498, 2147483648
      %v500 = vmul.f32 %v499, 1.442695
      %v501 = vpow.pop %v500
      %v502 = vadd.f32 %v501, 1.0
      %v503 = vrcp.pop %v502
      %v504 = vmul.f32 1.0, %v503
      %v505 = vtanh.pop %v498
      %507 = vrot.lane.b32.xlu0 %v423, 32
      %v508 = vpop.permute.xlu0 %507
      %v510 = vmul.f32 %v504, %v508
      %512 = vrot.lane.b32.xlu0 %v505, 64
      %v513 = vpop.permute.xlu0 %512
      %v515 = vmul.f32 %v504, %v513
      %517 = vrot.lane.b32.xlu0 %v515, 32
      %v518 = vpop.permute.xlu0 %517
      %v520 = vadd.f32 %v510, %v518
      %v521 = vtanh.pop %v520
      %523 = vrot.lane.b32.xlu0 %v521, 64
      %v524 = vpop.permute.xlu0 %523
      %v526 = vmul.f32 %v504, %v524
      %s527 = smul.u32 %s19, 8
      %p528 = scmp.lt.s32.totalorder %s527, 12
      %s529 = scalar_select %p528, 1, 0
      %v530 = vstv %s529
      %vm531 = vcmp.eq.s32.totalorder %v530, 1
      %532 = vrot.lane.b32.xlu0 %v422, 96
      %v533 = vpop.permute.xlu0 %532
      %v535 = vsel %vm531, %v526, %v533
      %v536 = vsel %vm531, %v520, %v508
      %538 = vrot.lane.b32.xlu0 %v535, 32
      %v539 = vpop.permute.xlu0 %538
      %v540 = vsel %vm424, %v539, 0
      %542 = vmatprep.subr.mxu0 0.0
      %543 = vmatpush1.msra.mxu0 %v418
      %544 = vmatprep.subr.mxu0 0.0
      %545 = vmatpush1.msra.mxu0 %v419
      %546 = vmatprep.subr.mxu0 0.0
      %547 = vmatpush1.msra.mxu0 %v420
      %548 = vmatprep.subr.mxu0 0.0
      %549 = vmatpush1.msra.mxu0 %v421
      %550 = vmatprep.subr.mxu0 0.0
      %551 = vmatpush1.msra.mxu0 0.0
      %552 = vmatprep.subr.mxu0 0.0
      %553 = vmatpush1.msra.mxu0 0.0
      %554 = vmatprep.subr.mxu0 0.0
      %555 = vmatpush1.msra.mxu0 0.0
      %556 = vmatprep.subr.mxu0 0.0
      %557 = vmatpush1.msra.mxu0 0.0
      %558 = vmatprep.subr.mxu0 0.0
      %559 = vmatpush1.msra.mxu0 0.0
      %560 = vmatprep.subr.mxu0 0.0
      %561 = vmatpush1.msra.mxu0 0.0
      %562 = vmatprep.subr.mxu0 0.0
      %563 = vmatpush1.msra.mxu0 0.0
      %564 = vmatprep.subr.mxu0 0.0
      %565 = vmatpush1.msra.mxu0 0.0
      %566 = vmatprep.subr.mxu0 0.0
      %567 = vmatpush1.msra.mxu0 0.0
      %568 = vmatprep.subr.mxu0 0.0
      %569 = vmatpush1.msra.mxu0 0.0
      %570 = vmatprep.subr.mxu0 0.0
      %571 = vmatpush1.msra.mxu0 0.0
      %572 = vmatprep.subr.mxu0 0.0
      %573 = vmatpush1.msra.mxu0 0.0
      %574 = vmatprep.subr.mxu0 0.0
      %575 = vmatpush1.msra.mxu0 0.0
      %576 = vmatprep.subr.mxu0 0.0
      %577 = vmatpush1.msra.mxu0 0.0
      %578 = vmatprep.subr.mxu0 0.0
      %579 = vmatpush1.msra.mxu0 0.0
      %580 = vmatprep.subr.mxu0 0.0
      %581 = vmatpush1.msra.mxu0 0.0
      %582 = vmatprep.subr.mxu0 0.0
      %583 = vmatpush1.msra.mxu0 0.0
      %584 = vmatprep.subr.mxu0 0.0
      %585 = vmatpush1.msra.mxu0 0.0
      %586 = vmatprep.subr.mxu0 0.0
      %587 = vmatpush1.msra.mxu0 0.0
      %588 = vmatprep.subr.mxu0 0.0
      %589 = vmatpush1.msra.mxu0 0.0
      %590 = vmatprep.subr.mxu0 0.0
      %591 = vmatpush1.msra.mxu0 0.0
      %592 = vmatprep.subr.mxu0 0.0
      %593 = vmatpush1.msra.mxu0 0.0
      %594 = vmatprep.subr.mxu0 0.0
      %595 = vmatpush1.msra.mxu0 0.0
      %596 = vmatprep.subr.mxu0 0.0
      %597 = vmatpush1.msra.mxu0 0.0
      %598 = vmatprep.subr.mxu0 0.0
      %599 = vmatpush1.msra.mxu0 0.0
      %600 = vmatprep.subr.mxu0 0.0
      %601 = vmatpush1.msra.mxu0 0.0
      %602 = vmatprep.subr.mxu0 0.0
      %603 = vmatpush1.msra.mxu0 0.0
      %604 = vmatprep.subr.mxu0 0.0
      %605 = vmatpush1.msra.mxu0 0.0
      %606 = vmatprep.mubr.f32.mxu0 0.0
      %607 = vmatmul.mubr.f32.gmra.mrb[0].mxu0 %v540
      %v608 = vpop.f32.mrb[0].mxu0
      %v609 = vadd.f32 0.0, %v608
      %v610 = vpop.f32.mrb[0].mxu0
      %611 = vdwg.mxu0
      %v612 = vadd.f32 %v385, %v609
      %v613 = vxor.u32 %v612, 2147483648
      %v614 = vmul.f32 %v613, 1.442695
      %v615 = vpow.pop %v614
      %v616 = vadd.f32 %v615, 1.0
      %v617 = vrcp.pop %v616
      %v618 = vmul.f32 1.0, %v617
      %v619 = vtanh.pop %v612
      %v620 = vmul.f32 %v618, %v536
      %622 = vrot.lane.b32.xlu0 %v619, 64
      %v623 = vpop.permute.xlu0 %622
      %v625 = vmul.f32 %v618, %v623
      %627 = vrot.lane.b32.xlu0 %v625, 32
      %v628 = vpop.permute.xlu0 %627
      %v630 = vadd.f32 %v620, %v628
      %v631 = vtanh.pop %v630
      %633 = vrot.lane.b32.xlu0 %v631, 64
      %v634 = vpop.permute.xlu0 %633
      %v636 = vmul.f32 %v618, %v634
      %s637 = sadd.s32 %s527, 1
      %p638 = scmp.lt.s32.totalorder %s637, 12
      %s639 = scalar_select %p638, 1, 0
      %v640 = vstv %s639
      %vm641 = vcmp.eq.s32.totalorder %v640, 1
      %v642 = vsel %vm641, %v636, %v535
      %v643 = vsel %vm641, %v630, %v536
      %645 = vrot.lane.b32.xlu0 %v642, 32
      %v646 = vpop.permute.xlu0 %645
      %v647 = vsel %vm424, %v646, 0
      %649 = vmatprep.subr.mxu0 0.0
      %650 = vmatpush1.msra.mxu0 %v418
      %651 = vmatprep.subr.mxu0 0.0
      %652 = vmatpush1.msra.mxu0 %v419
      %653 = vmatprep.subr.mxu0 0.0
      %654 = vmatpush1.msra.mxu0 %v420
      %655 = vmatprep.subr.mxu0 0.0
      %656 = vmatpush1.msra.mxu0 %v421
      %657 = vmatprep.subr.mxu0 0.0
      %658 = vmatpush1.msra.mxu0 0.0
      %659 = vmatprep.subr.mxu0 0.0
      %660 = vmatpush1.msra.mxu0 0.0
      %661 = vmatprep.subr.mxu0 0.0
      %662 = vmatpush1.msra.mxu0 0.0
      %663 = vmatprep.subr.mxu0 0.0
      %664 = vmatpush1.msra.mxu0 0.0
      %665 = vmatprep.subr.mxu0 0.0
      %666 = vmatpush1.msra.mxu0 0.0
      %667 = vmatprep.subr.mxu0 0.0
      %668 = vmatpush1.msra.mxu0 0.0
      %669 = vmatprep.subr.mxu0 0.0
      %670 = vmatpush1.msra.mxu0 0.0
      %671 = vmatprep.subr.mxu0 0.0
      %672 = vmatpush1.msra.mxu0 0.0
      %673 = vmatprep.subr.mxu0 0.0
      %674 = vmatpush1.msra.mxu0 0.0
      %675 = vmatprep.subr.mxu0 0.0
      %676 = vmatpush1.msra.mxu0 0.0
      %677 = vmatprep.subr.mxu0 0.0
      %678 = vmatpush1.msra.mxu0 0.0
      %679 = vmatprep.subr.mxu0 0.0
      %680 = vmatpush1.msra.mxu0 0.0
      %681 = vmatprep.subr.mxu0 0.0
      %682 = vmatpush1.msra.mxu0 0.0
      %683 = vmatprep.subr.mxu0 0.0
      %684 = vmatpush1.msra.mxu0 0.0
      %685 = vmatprep.subr.mxu0 0.0
      %686 = vmatpush1.msra.mxu0 0.0
      %687 = vmatprep.subr.mxu0 0.0
      %688 = vmatpush1.msra.mxu0 0.0
      %689 = vmatprep.subr.mxu0 0.0
      %690 = vmatpush1.msra.mxu0 0.0
      %691 = vmatprep.subr.mxu0 0.0
      %692 = vmatpush1.msra.mxu0 0.0
      %693 = vmatprep.subr.mxu0 0.0
      %694 = vmatpush1.msra.mxu0 0.0
      %695 = vmatprep.subr.mxu0 0.0
      %696 = vmatpush1.msra.mxu0 0.0
      %697 = vmatprep.subr.mxu0 0.0
      %698 = vmatpush1.msra.mxu0 0.0
      %699 = vmatprep.subr.mxu0 0.0
      %700 = vmatpush1.msra.mxu0 0.0
      %701 = vmatprep.subr.mxu0 0.0
      %702 = vmatpush1.msra.mxu0 0.0
      %703 = vmatprep.subr.mxu0 0.0
      %704 = vmatpush1.msra.mxu0 0.0
      %705 = vmatprep.subr.mxu0 0.0
      %706 = vmatpush1.msra.mxu0 0.0
      %707 = vmatprep.subr.mxu0 0.0
      %708 = vmatpush1.msra.mxu0 0.0
      %709 = vmatprep.subr.mxu0 0.0
      %710 = vmatpush1.msra.mxu0 0.0
      %711 = vmatprep.subr.mxu0 0.0
      %712 = vmatpush1.msra.mxu0 0.0
      %713 = vmatprep.mubr.f32.mxu0 0.0
      %714 = vmatmul.mubr.f32.gmra.mrb[0].mxu0 %v647
      %v715 = vpop.f32.mrb[0].mxu0
      %v716 = vadd.f32 0.0, %v715
      %v717 = vpop.f32.mrb[0].mxu0
      %718 = vdwg.mxu0
      %v719 = vadd.f32 %v390, %v716
      %v720 = vxor.u32 %v719, 2147483648
      %v721 = vmul.f32 %v720, 1.442695
      %v722 = vpow.pop %v721
      %v723 = vadd.f32 %v722, 1.0
      %v724 = vrcp.pop %v723
      %v725 = vmul.f32 1.0, %v724
      %v726 = vtanh.pop %v719
      %v727 = vmul.f32 %v725, %v643
      %729 = vrot.lane.b32.xlu0 %v726, 64
      %v730 = vpop.permute.xlu0 %729
      %v732 = vmul.f32 %v725, %v730
      %734 = vrot.lane.b32.xlu0 %v732, 32
      %v735 = vpop.permute.xlu0 %734
      %v737 = vadd.f32 %v727, %v735
      %v738 = vtanh.pop %v737
      %740 = vrot.lane.b32.xlu0 %v738, 64
      %v741 = vpop.permute.xlu0 %740
      %v743 = vmul.f32 %v725, %v741
      %s744 = sadd.s32 %s527, 2
      %p745 = scmp.lt.s32.totalorder %s744, 12
      %s746 = scalar_select %p745, 1, 0
      %v747 = vstv %s746
      %vm748 = vcmp.eq.s32.totalorder %v747, 1
      %v749 = vsel %vm748, %v743, %v642
      %v750 = vsel %vm748, %v737, %v643
      %752 = vrot.lane.b32.xlu0 %v749, 32
      %v753 = vpop.permute.xlu0 %752
      %v754 = vsel %vm424, %v753, 0
      %756 = vmatprep.subr.mxu0 0.0
      %757 = vmatpush1.msra.mxu0 %v418
      %758 = vmatprep.subr.mxu0 0.0
      %759 = vmatpush1.msra.mxu0 %v419
      %760 = vmatprep.subr.mxu0 0.0
      %761 = vmatpush1.msra.mxu0 %v420
      %762 = vmatprep.subr.mxu0 0.0
      %763 = vmatpush1.msra.mxu0 %v421
      %764 = vmatprep.subr.mxu0 0.0
      %765 = vmatpush1.msra.mxu0 0.0
      %766 = vmatprep.subr.mxu0 0.0
      %767 = vmatpush1.msra.mxu0 0.0
      %768 = vmatprep.subr.mxu0 0.0
      %769 = vmatpush1.msra.mxu0 0.0
      %770 = vmatprep.subr.mxu0 0.0
      %771 = vmatpush1.msra.mxu0 0.0
      %772 = vmatprep.subr.mxu0 0.0
      %773 = vmatpush1.msra.mxu0 0.0
      %774 = vmatprep.subr.mxu0 0.0
      %775 = vmatpush1.msra.mxu0 0.0
      %776 = vmatprep.subr.mxu0 0.0
      %777 = vmatpush1.msra.mxu0 0.0
      %778 = vmatprep.subr.mxu0 0.0
      %779 = vmatpush1.msra.mxu0 0.0
      %780 = vmatprep.subr.mxu0 0.0
      %781 = vmatpush1.msra.mxu0 0.0
      %782 = vmatprep.subr.mxu0 0.0
      %783 = vmatpush1.msra.mxu0 0.0
      %784 = vmatprep.subr.mxu0 0.0
      %785 = vmatpush1.msra.mxu0 0.0
      %786 = vmatprep.subr.mxu0 0.0
      %787 = vmatpush1.msra.mxu0 0.0
      %788 = vmatprep.subr.mxu0 0.0
      %789 = vmatpush1.msra.mxu0 0.0
      %790 = vmatprep.subr.mxu0 0.0
      %791 = vmatpush1.msra.mxu0 0.0
      %792 = vmatprep.subr.mxu0 0.0
      %793 = vmatpush1.msra.mxu0 0.0
      %794 = vmatprep.subr.mxu0 0.0
      %795 = vmatpush1.msra.mxu0 0.0
      %796 = vmatprep.subr.mxu0 0.0
      %797 = vmatpush1.msra.mxu0 0.0
      %798 = vmatprep.subr.mxu0 0.0
      %799 = vmatpush1.msra.mxu0 0.0
      %800 = vmatprep.subr.mxu0 0.0
      %801 = vmatpush1.msra.mxu0 0.0
      %802 = vmatprep.subr.mxu0 0.0
      %803 = vmatpush1.msra.mxu0 0.0
      %804 = vmatprep.subr.mxu0 0.0
      %805 = vmatpush1.msra.mxu0 0.0
      %806 = vmatprep.subr.mxu0 0.0
      %807 = vmatpush1.msra.mxu0 0.0
      %808 = vmatprep.subr.mxu0 0.0
      %809 = vmatpush1.msra.mxu0 0.0
      %810 = vmatprep.subr.mxu0 0.0
      %811 = vmatpush1.msra.mxu0 0.0
      %812 = vmatprep.subr.mxu0 0.0
      %813 = vmatpush1.msra.mxu0 0.0
      %814 = vmatprep.subr.mxu0 0.0
      %815 = vmatpush1.msra.mxu0 0.0
      %816 = vmatprep.subr.mxu0 0.0
      %817 = vmatpush1.msra.mxu0 0.0
      %818 = vmatprep.subr.mxu0 0.0
      %819 = vmatpush1.msra.mxu0 0.0
      %820 = vmatprep.mubr.f32.mxu0 0.0
      %821 = vmatmul.mubr.f32.gmra.mrb[0].mxu0 %v754
      %v822 = vpop.f32.mrb[0].mxu0
      %v823 = vadd.f32 0.0, %v822
      %v824 = vpop.f32.mrb[0].mxu0
      %825 = vdwg.mxu0
      %v826 = vadd.f32 %v395, %v823
      %v827 = vxor.u32 %v826, 2147483648
      %v828 = vmul.f32 %v827, 1.442695
      %v829 = vpow.pop %v828
      %v830 = vadd.f32 %v829, 1.0
      %v831 = vrcp.pop %v830
      %v832 = vmul.f32 1.0, %v831
      %v833 = vtanh.pop %v826
      %v834 = vmul.f32 %v832, %v750
      %836 = vrot.lane.b32.xlu0 %v833, 64
      %v837 = vpop.permute.xlu0 %836
      %v839 = vmul.f32 %v832, %v837
      %841 = vrot.lane.b32.xlu0 %v839, 32
      %v842 = vpop.permute.xlu0 %841
      %v844 = vadd.f32 %v834, %v842
      %v845 = vtanh.pop %v844
      %847 = vrot.lane.b32.xlu0 %v845, 64
      %v848 = vpop.permute.xlu0 %847
      %v850 = vmul.f32 %v832, %v848
      %s851 = sadd.s32 %s527, 3
      %p852 = scmp.lt.s32.totalorder %s851, 12
      %s853 = scalar_select %p852, 1, 0
      %v854 = vstv %s853
      %vm855 = vcmp.eq.s32.totalorder %v854, 1
      %v856 = vsel %vm855, %v850, %v749
      %v857 = vsel %vm855, %v844, %v750
      %859 = vrot.lane.b32.xlu0 %v856, 32
      %v860 = vpop.permute.xlu0 %859
      %v861 = vsel %vm424, %v860, 0
      %863 = vmatprep.subr.mxu0 0.0
      %864 = vmatpush1.msra.mxu0 %v418
      %865 = vmatprep.subr.mxu0 0.0
      %866 = vmatpush1.msra.mxu0 %v419
      %867 = vmatprep.subr.mxu0 0.0
      %868 = vmatpush1.msra.mxu0 %v420
      %869 = vmatprep.subr.mxu0 0.0
      %870 = vmatpush1.msra.mxu0 %v421
      %871 = vmatprep.subr.mxu0 0.0
      %872 = vmatpush1.msra.mxu0 0.0
      %873 = vmatprep.subr.mxu0 0.0
      %874 = vmatpush1.msra.mxu0 0.0
      %875 = vmatprep.subr.mxu0 0.0
      %876 = vmatpush1.msra.mxu0 0.0
      %877 = vmatprep.subr.mxu0 0.0
      %878 = vmatpush1.msra.mxu0 0.0
      %879 = vmatprep.subr.mxu0 0.0
      %880 = vmatpush1.msra.mxu0 0.0
      %881 = vmatprep.subr.mxu0 0.0
      %882 = vmatpush1.msra.mxu0 0.0
      %883 = vmatprep.subr.mxu0 0.0
      %884 = vmatpush1.msra.mxu0 0.0
      %885 = vmatprep.subr.mxu0 0.0
      %886 = vmatpush1.msra.mxu0 0.0
      %887 = vmatprep.subr.mxu0 0.0
      %888 = vmatpush1.msra.mxu0 0.0
      %889 = vmatprep.subr.mxu0 0.0
      %890 = vmatpush1.msra.mxu0 0.0
      %891 = vmatprep.subr.mxu0 0.0
      %892 = vmatpush1.msra.mxu0 0.0
      %893 = vmatprep.subr.mxu0 0.0
      %894 = vmatpush1.msra.mxu0 0.0
      %895 = vmatprep.subr.mxu0 0.0
      %896 = vmatpush1.msra.mxu0 0.0
      %897 = vmatprep.subr.mxu0 0.0
      %898 = vmatpush1.msra.mxu0 0.0
      %899 = vmatprep.subr.mxu0 0.0
      %900 = vmatpush1.msra.mxu0 0.0
      %901 = vmatprep.subr.mxu0 0.0
      %902 = vmatpush1.msra.mxu0 0.0
      %903 = vmatprep.subr.mxu0 0.0
      %904 = vmatpush1.msra.mxu0 0.0
      %905 = vmatprep.subr.mxu0 0.0
      %906 = vmatpush1.msra.mxu0 0.0
      %907 = vmatprep.subr.mxu0 0.0
      %908 = vmatpush1.msra.mxu0 0.0
      %909 = vmatprep.subr.mxu0 0.0
      %910 = vmatpush1.msra.mxu0 0.0
      %911 = vmatprep.subr.mxu0 0.0
      %912 = vmatpush1.msra.mxu0 0.0
      %913 = vmatprep.subr.mxu0 0.0
      %914 = vmatpush1.msra.mxu0 0.0
      %915 = vmatprep.subr.mxu0 0.0
      %916 = vmatpush1.msra.mxu0 0.0
      %917 = vmatprep.subr.mxu0 0.0
      %918 = vmatpush1.msra.mxu0 0.0
      %919 = vmatprep.subr.mxu0 0.0
      %920 = vmatpush1.msra.mxu0 0.0
      %921 = vmatprep.subr.mxu0 0.0
      %922 = vmatpush1.msra.mxu0 0.0
      %923 = vmatprep.subr.mxu0 0.0
      %924 = vmatpush1.msra.mxu0 0.0
      %925 = vmatprep.subr.mxu0 0.0
      %926 = vmatpush1.msra.mxu0 0.0
      %927 = vmatprep.mubr.f32.mxu0 0.0
      %928 = vmatmul.mubr.f32.gmra.mrb[0].mxu0 %v861
      %v929 = vpop.f32.mrb[0].mxu0
      %v930 = vadd.f32 0.0, %v929
      %v931 = vpop.f32.mrb[0].mxu0
      %932 = vdwg.mxu0
      %v933 = vadd.f32 %v400, %v930
      %v934 = vxor.u32 %v933, 2147483648
      %v935 = vmul.f32 %v934, 1.442695
      %v936 = vpow.pop %v935
      %v937 = vadd.f32 %v936, 1.0
      %v938 = vrcp.pop %v937
      %v939 = vmul.f32 1.0, %v938
      %v940 = vtanh.pop %v933
      %v941 = vmul.f32 %v939, %v857
      %943 = vrot.lane.b32.xlu0 %v940, 64
      %v944 = vpop.permute.xlu0 %943
      %v946 = vmul.f32 %v939, %v944
      %948 = vrot.lane.b32.xlu0 %v946, 32
      %v949 = vpop.permute.xlu0 %948
      %v951 = vadd.f32 %v941, %v949
      %v952 = vtanh.pop %v951
      %954 = vrot.lane.b32.xlu0 %v952, 64
      %v955 = vpop.permute.xlu0 %954
      %v957 = vmul.f32 %v939, %v955
      %s958 = sadd.s32 %s527, 4
      %p959 = scmp.lt.s32.totalorder %s958, 12
      %s960 = scalar_select %p959, 1, 0
      %v961 = vstv %s960
      %vm962 = vcmp.eq.s32.totalorder %v961, 1
      %v963 = vsel %vm962, %v957, %v856
      %v964 = vsel %vm962, %v951, %v857
      %966 = vrot.lane.b32.xlu0 %v963, 32
      %v967 = vpop.permute.xlu0 %966
      %v968 = vsel %vm424, %v967, 0
      %970 = vmatprep.subr.mxu0 0.0
      %971 = vmatpush1.msra.mxu0 %v418
      %972 = vmatprep.subr.mxu0 0.0
      %973 = vmatpush1.msra.mxu0 %v419
      %974 = vmatprep.subr.mxu0 0.0
      %975 = vmatpush1.msra.mxu0 %v420
      %976 = vmatprep.subr.mxu0 0.0
      %977 = vmatpush1.msra.mxu0 %v421
      %978 = vmatprep.subr.mxu0 0.0
      %979 = vmatpush1.msra.mxu0 0.0
      %980 = vmatprep.subr.mxu0 0.0
      %981 = vmatpush1.msra.mxu0 0.0
      %982 = vmatprep.subr.mxu0 0.0
      %983 = vmatpush1.msra.mxu0 0.0
      %984 = vmatprep.subr.mxu0 0.0
      %985 = vmatpush1.msra.mxu0 0.0
      %986 = vmatprep.subr.mxu0 0.0
      %987 = vmatpush1.msra.mxu0 0.0
      %988 = vmatprep.subr.mxu0 0.0
      %989 = vmatpush1.msra.mxu0 0.0
      %990 = vmatprep.subr.mxu0 0.0
      %991 = vmatpush1.msra.mxu0 0.0
      %992 = vmatprep.subr.mxu0 0.0
      %993 = vmatpush1.msra.mxu0 0.0
      %994 = vmatprep.subr.mxu0 0.0
      %995 = vmatpush1.msra.mxu0 0.0
      %996 = vmatprep.subr.mxu0 0.0
      %997 = vmatpush1.msra.mxu0 0.0
      %998 = vmatprep.subr.mxu0 0.0
      %999 = vmatpush1.msra.mxu0 0.0
      %1000 = vmatprep.subr.mxu0 0.0
      %1001 = vmatpush1.msra.mxu0 0.0
      %1002 = vmatprep.subr.mxu0 0.0
      %1003 = vmatpush1.msra.mxu0 0.0
      %1004 = vmatprep.subr.mxu0 0.0
      %1005 = vmatpush1.msra.mxu0 0.0
      %1006 = vmatprep.subr.mxu0 0.0
      %1007 = vmatpush1.msra.mxu0 0.0
      %1008 = vmatprep.subr.mxu0 0.0
      %1009 = vmatpush1.msra.mxu0 0.0
      %1010 = vmatprep.subr.mxu0 0.0
      %1011 = vmatpush1.msra.mxu0 0.0
      %1012 = vmatprep.subr.mxu0 0.0
      %1013 = vmatpush1.msra.mxu0 0.0
      %1014 = vmatprep.subr.mxu0 0.0
      %1015 = vmatpush1.msra.mxu0 0.0
      %1016 = vmatprep.subr.mxu0 0.0
      %1017 = vmatpush1.msra.mxu0 0.0
      %1018 = vmatprep.subr.mxu0 0.0
      %1019 = vmatpush1.msra.mxu0 0.0
      %1020 = vmatprep.subr.mxu0 0.0
      %1021 = vmatpush1.msra.mxu0 0.0
      %1022 = vmatprep.subr.mxu0 0.0
      %1023 = vmatpush1.msra.mxu0 0.0
      %1024 = vmatprep.subr.mxu0 0.0
      %1025 = vmatpush1.msra.mxu0 0.0
      %1026 = vmatprep.subr.mxu0 0.0
      %1027 = vmatpush1.msra.mxu0 0.0
      %1028 = vmatprep.subr.mxu0 0.0
      %1029 = vmatpush1.msra.mxu0 0.0
      %1030 = vmatprep.subr.mxu0 0.0
      %1031 = vmatpush1.msra.mxu0 0.0
      %1032 = vmatprep.subr.mxu0 0.0
      %1033 = vmatpush1.msra.mxu0 0.0
      %1034 = vmatprep.mubr.f32.mxu0 0.0
      %1035 = vmatmul.mubr.f32.gmra.mrb[0].mxu0 %v968
      %v1036 = vpop.f32.mrb[0].mxu0
      %v1037 = vadd.f32 0.0, %v1036
      %v1038 = vpop.f32.mrb[0].mxu0
      %1039 = vdwg.mxu0
      %v1040 = vadd.f32 %v405, %v1037
      %v1041 = vxor.u32 %v1040, 2147483648
      %v1042 = vmul.f32 %v1041, 1.442695
      %v1043 = vpow.pop %v1042
      %v1044 = vadd.f32 %v1043, 1.0
      %v1045 = vrcp.pop %v1044
      %v1046 = vmul.f32 1.0, %v1045
      %v1047 = vtanh.pop %v1040
      %v1048 = vmul.f32 %v1046, %v964
      %1050 = vrot.lane.b32.xlu0 %v1047, 64
      %v1051 = vpop.permute.xlu0 %1050
      %v1053 = vmul.f32 %v1046, %v1051
      %1055 = vrot.lane.b32.xlu0 %v1053, 32
      %v1056 = vpop.permute.xlu0 %1055
      %v1058 = vadd.f32 %v1048, %v1056
      %v1059 = vtanh.pop %v1058
      %1061 = vrot.lane.b32.xlu0 %v1059, 64
      %v1062 = vpop.permute.xlu0 %1061
      %v1064 = vmul.f32 %v1046, %v1062
      %s1065 = sadd.s32 %s527, 5
      %p1066 = scmp.lt.s32.totalorder %s1065, 12
      %s1067 = scalar_select %p1066, 1, 0
      %v1068 = vstv %s1067
      %vm1069 = vcmp.eq.s32.totalorder %v1068, 1
      %v1070 = vsel %vm1069, %v1064, %v963
      %v1071 = vsel %vm1069, %v1058, %v964
      %1073 = vrot.lane.b32.xlu0 %v1070, 32
      %v1074 = vpop.permute.xlu0 %1073
      %v1075 = vsel %vm424, %v1074, 0
      %1077 = vmatprep.subr.mxu0 0.0
      %1078 = vmatpush1.msra.mxu0 %v418
      %1079 = vmatprep.subr.mxu0 0.0
      %1080 = vmatpush1.msra.mxu0 %v419
      %1081 = vmatprep.subr.mxu0 0.0
      %1082 = vmatpush1.msra.mxu0 %v420
      %1083 = vmatprep.subr.mxu0 0.0
      %1084 = vmatpush1.msra.mxu0 %v421
      %1085 = vmatprep.subr.mxu0 0.0
      %1086 = vmatpush1.msra.mxu0 0.0
      %1087 = vmatprep.subr.mxu0 0.0
      %1088 = vmatpush1.msra.mxu0 0.0
      %1089 = vmatprep.subr.mxu0 0.0
      %1090 = vmatpush1.msra.mxu0 0.0
      %1091 = vmatprep.subr.mxu0 0.0
      %1092 = vmatpush1.msra.mxu0 0.0
      %1093 = vmatprep.subr.mxu0 0.0
      %1094 = vmatpush1.msra.mxu0 0.0
      %1095 = vmatprep.subr.mxu0 0.0
      %1096 = vmatpush1.msra.mxu0 0.0
      %1097 = vmatprep.subr.mxu0 0.0
      %1098 = vmatpush1.msra.mxu0 0.0
      %1099 = vmatprep.subr.mxu0 0.0
      %1100 = vmatpush1.msra.mxu0 0.0
      %1101 = vmatprep.subr.mxu0 0.0
      %1102 = vmatpush1.msra.mxu0 0.0
      %1103 = vmatprep.subr.mxu0 0.0
      %1104 = vmatpush1.msra.mxu0 0.0
      %1105 = vmatprep.subr.mxu0 0.0
      %1106 = vmatpush1.msra.mxu0 0.0
      %1107 = vmatprep.subr.mxu0 0.0
      %1108 = vmatpush1.msra.mxu0 0.0
      %1109 = vmatprep.subr.mxu0 0.0
      %1110 = vmatpush1.msra.mxu0 0.0
      %1111 = vmatprep.subr.mxu0 0.0
      %1112 = vmatpush1.msra.mxu0 0.0
      %1113 = vmatprep.subr.mxu0 0.0
      %1114 = vmatpush1.msra.mxu0 0.0
      %1115 = vmatprep.subr.mxu0 0.0
      %1116 = vmatpush1.msra.mxu0 0.0
      %1117 = vmatprep.subr.mxu0 0.0
      %1118 = vmatpush1.msra.mxu0 0.0
      %1119 = vmatprep.subr.mxu0 0.0
      %1120 = vmatpush1.msra.mxu0 0.0
      %1121 = vmatprep.subr.mxu0 0.0
      %1122 = vmatpush1.msra.mxu0 0.0
      %1123 = vmatprep.subr.mxu0 0.0
      %1124 = vmatpush1.msra.mxu0 0.0
      %1125 = vmatprep.subr.mxu0 0.0
      %1126 = vmatpush1.msra.mxu0 0.0
      %1127 = vmatprep.subr.mxu0 0.0
      %1128 = vmatpush1.msra.mxu0 0.0
      %1129 = vmatprep.subr.mxu0 0.0
      %1130 = vmatpush1.msra.mxu0 0.0
      %1131 = vmatprep.subr.mxu0 0.0
      %1132 = vmatpush1.msra.mxu0 0.0
      %1133 = vmatprep.subr.mxu0 0.0
      %1134 = vmatpush1.msra.mxu0 0.0
      %1135 = vmatprep.subr.mxu0 0.0
      %1136 = vmatpush1.msra.mxu0 0.0
      %1137 = vmatprep.subr.mxu0 0.0
      %1138 = vmatpush1.msra.mxu0 0.0
      %1139 = vmatprep.subr.mxu0 0.0
      %1140 = vmatpush1.msra.mxu0 0.0
      %1141 = vmatprep.mubr.f32.mxu0 0.0
      %1142 = vmatmul.mubr.f32.gmra.mrb[0].mxu0 %v1075
      %v1143 = vpop.f32.mrb[0].mxu0
      %v1144 = vadd.f32 0.0, %v1143
      %v1145 = vpop.f32.mrb[0].mxu0
      %1146 = vdwg.mxu0
      %v1147 = vadd.f32 %v410, %v1144
      %v1148 = vxor.u32 %v1147, 2147483648
      %v1149 = vmul.f32 %v1148, 1.442695
      %v1150 = vpow.pop %v1149
      %v1151 = vadd.f32 %v1150, 1.0
      %v1152 = vrcp.pop %v1151
      %v1153 = vmul.f32 1.0, %v1152
      %v1154 = vtanh.pop %v1147
      %v1155 = vmul.f32 %v1153, %v1071
      %1157 = vrot.lane.b32.xlu0 %v1154, 64
      %v1158 = vpop.permute.xlu0 %1157
      %v1160 = vmul.f32 %v1153, %v1158
      %1162 = vrot.lane.b32.xlu0 %v1160, 32
      %v1163 = vpop.permute.xlu0 %1162
      %v1165 = vadd.f32 %v1155, %v1163
      %v1166 = vtanh.pop %v1165
      %1168 = vrot.lane.b32.xlu0 %v1166, 64
      %v1169 = vpop.permute.xlu0 %1168
      %v1171 = vmul.f32 %v1153, %v1169
      %s1172 = sadd.s32 %s527, 6
      %p1173 = scmp.lt.s32.totalorder %s1172, 12
      %s1174 = scalar_select %p1173, 1, 0
      %v1175 = vstv %s1174
      %vm1176 = vcmp.eq.s32.totalorder %v1175, 1
      %v1177 = vsel %vm1176, %v1171, %v1070
      %v1178 = vsel %vm1176, %v1165, %v1071
      %1180 = vrot.lane.b32.xlu0 %v1177, 32
      %v1181 = vpop.permute.xlu0 %1180
      %v1182 = vsel %vm424, %v1181, 0
      %1184 = vmatprep.subr.mxu0 0.0
      %1185 = vmatpush1.msra.mxu0 %v418
      %1186 = vmatprep.subr.mxu0 0.0
      %1187 = vmatpush1.msra.mxu0 %v419
      %1188 = vmatprep.subr.mxu0 0.0
      %1189 = vmatpush1.msra.mxu0 %v420
      %1190 = vmatprep.subr.mxu0 0.0
      %1191 = vmatpush1.msra.mxu0 %v421
      %1192 = vmatprep.subr.mxu0 0.0
      %1193 = vmatpush1.msra.mxu0 0.0
      %1194 = vmatprep.subr.mxu0 0.0
      %1195 = vmatpush1.msra.mxu0 0.0
      %1196 = vmatprep.subr.mxu0 0.0
      %1197 = vmatpush1.msra.mxu0 0.0
      %1198 = vmatprep.subr.mxu0 0.0
      %1199 = vmatpush1.msra.mxu0 0.0
      %1200 = vmatprep.subr.mxu0 0.0
      %1201 = vmatpush1.msra.mxu0 0.0
      %1202 = vmatprep.subr.mxu0 0.0
      %1203 = vmatpush1.msra.mxu0 0.0
      %1204 = vmatprep.subr.mxu0 0.0
      %1205 = vmatpush1.msra.mxu0 0.0
      %1206 = vmatprep.subr.mxu0 0.0
      %1207 = vmatpush1.msra.mxu0 0.0
      %1208 = vmatprep.subr.mxu0 0.0
      %1209 = vmatpush1.msra.mxu0 0.0
      %1210 = vmatprep.subr.mxu0 0.0
      %1211 = vmatpush1.msra.mxu0 0.0
      %1212 = vmatprep.subr.mxu0 0.0
      %1213 = vmatpush1.msra.mxu0 0.0
      %1214 = vmatprep.subr.mxu0 0.0
      %1215 = vmatpush1.msra.mxu0 0.0
      %1216 = vmatprep.subr.mxu0 0.0
      %1217 = vmatpush1.msra.mxu0 0.0
      %1218 = vmatprep.subr.mxu0 0.0
      %1219 = vmatpush1.msra.mxu0 0.0
      %1220 = vmatprep.subr.mxu0 0.0
      %1221 = vmatpush1.msra.mxu0 0.0
      %1222 = vmatprep.subr.mxu0 0.0
      %1223 = vmatpush1.msra.mxu0 0.0
      %1224 = vmatprep.subr.mxu0 0.0
      %1225 = vmatpush1.msra.mxu0 0.0
      %1226 = vmatprep.subr.mxu0 0.0
      %1227 = vmatpush1.msra.mxu0 0.0
      %1228 = vmatprep.subr.mxu0 0.0
      %1229 = vmatpush1.msra.mxu0 0.0
      %1230 = vmatprep.subr.mxu0 0.0
      %1231 = vmatpush1.msra.mxu0 0.0
      %1232 = vmatprep.subr.mxu0 0.0
      %1233 = vmatpush1.msra.mxu0 0.0
      %1234 = vmatprep.subr.mxu0 0.0
      %1235 = vmatpush1.msra.mxu0 0.0
      %1236 = vmatprep.subr.mxu0 0.0
      %1237 = vmatpush1.msra.mxu0 0.0
      %1238 = vmatprep.subr.mxu0 0.0
      %1239 = vmatpush1.msra.mxu0 0.0
      %1240 = vmatprep.subr.mxu0 0.0
      %1241 = vmatpush1.msra.mxu0 0.0
      %1242 = vmatprep.subr.mxu0 0.0
      %1243 = vmatpush1.msra.mxu0 0.0
      %1244 = vmatprep.subr.mxu0 0.0
      %1245 = vmatpush1.msra.mxu0 0.0
      %1246 = vmatprep.subr.mxu0 0.0
      %1247 = vmatpush1.msra.mxu0 0.0
      %1248 = vmatprep.mubr.f32.mxu0 0.0
      %1249 = vmatmul.mubr.f32.gmra.mrb[0].mxu0 %v1182
      %v1250 = vpop.f32.mrb[0].mxu0
      %v1251 = vadd.f32 0.0, %v1250
      %v1252 = vpop.f32.mrb[0].mxu0
      %1253 = vdwg.mxu0
      %v1254 = vadd.f32 %v415, %v1251
      %v1255 = vxor.u32 %v1254, 2147483648
      %v1256 = vmul.f32 %v1255, 1.442695
      %v1257 = vpow.pop %v1256
      %v1258 = vadd.f32 %v1257, 1.0
      %v1259 = vrcp.pop %v1258
      %v1260 = vmul.f32 1.0, %v1259
      %v1261 = vtanh.pop %v1254
      %v1262 = vmul.f32 %v1260, %v1178
      %1264 = vrot.lane.b32.xlu0 %v1261, 64
      %v1265 = vpop.permute.xlu0 %1264
      %v1267 = vmul.f32 %v1260, %v1265
      %1269 = vrot.lane.b32.xlu0 %v1267, 32
      %v1270 = vpop.permute.xlu0 %1269
      %v1272 = vadd.f32 %v1262, %v1270
      %v1273 = vtanh.pop %v1272
      %1275 = vrot.lane.b32.xlu0 %v1273, 64
      %v1276 = vpop.permute.xlu0 %1275
      %v1278 = vmul.f32 %v1260, %v1276
      %s1279 = sadd.s32 %s527, 7
      %p1280 = scmp.lt.s32.totalorder %s1279, 12
      %s1281 = scalar_select %p1280, 1, 0
      %v1282 = vstv %s1281
      %vm1283 = vcmp.eq.s32.totalorder %v1282, 1
      %v1284 = vsel %vm1283, %v1278, %v1177
      %v1285 = vsel %vm1283, %v1272, %v1178
      %1287 = vrot.lane.b32.xlu0 %v1284, 32
      %v1288 = vpop.permute.xlu0 %1287
      %1290 = vst.msk [vmem:[#allocation2] sm:$0xff] %vm424, %v1288
      %1292 = vrot.lane.b32.xlu0 %v1285, 96
      %v1293 = vpop.permute.xlu0 %1292
      %1295 = vst.msk [vmem:[#allocation3] sm:$0xff] %vm424, %v1293
      %p1296 = scmp.eq.s32.totalorder %s19, 1
      // Predicated region
      $region49: #{tpu_custom_call.1} parent=43 // pred_check
        %p1297 = pneg %p1296
      $region50: #{tpu_custom_call.1} parent=43 // pred_check_branch
        %1299 = sbr.rel (%p1297) target = $region52
      $region51: #{tpu_custom_call.1} parent=43 // pred_region
        %v1300 = vld [vmem:[#allocation2] sm:$0xff]
        %v1301 = vld [vmem:[%s4] sm:$0xff]
        %v1302 = vld [vmem:[%s4 + $0x8] sm:$0xff]
        %v1303 = vld [vmem:[%s4 + $0x10] sm:$0xff]
        %v1304 = vld [vmem:[%s4 + $0x18] sm:$0xff]
        %v1305 = vld [vmem:[#allocation4] sm:$0x1]
        %v1307 = vlaneseq
        %v1308 = vshrl.u32 %v1307, 7
        %v1309 = vsub.s32 0, %v1308
        %v1310 = vrot.slane %v1305, %v1309
        %v1313 = vsel %vm424, %v1300, 0
        %1315 = vmatprep.subr.mxu0 0.0
        %1316 = vmatpush1.msra.mxu0 %v1301
        %1317 = vmatprep.subr.mxu0 0.0
        %1318 = vmatpush1.msra.mxu0 %v1302
        %1319 = vmatprep.subr.mxu0 0.0
        %1320 = vmatpush1.msra.mxu0 %v1303
        %1321 = vmatprep.subr.mxu0 0.0
        %1322 = vmatpush1.msra.mxu0 %v1304
        %1323 = vmatprep.subr.mxu0 0.0
        %1324 = vmatpush1.msra.mxu0 0.0
        %1325 = vmatprep.subr.mxu0 0.0
        %1326 = vmatpush1.msra.mxu0 0.0
        %1327 = vmatprep.subr.mxu0 0.0
        %1328 = vmatpush1.msra.mxu0 0.0
        %1329 = vmatprep.subr.mxu0 0.0
        %1330 = vmatpush1.msra.mxu0 0.0
        %1331 = vmatprep.subr.mxu0 0.0
        %1332 = vmatpush1.msra.mxu0 0.0
        %1333 = vmatprep.subr.mxu0 0.0
        %1334 = vmatpush1.msra.mxu0 0.0
        %1335 = vmatprep.subr.mxu0 0.0
        %1336 = vmatpush1.msra.mxu0 0.0
        %1337 = vmatprep.subr.mxu0 0.0
        %1338 = vmatpush1.msra.mxu0 0.0
        %1339 = vmatprep.subr.mxu0 0.0
        %1340 = vmatpush1.msra.mxu0 0.0
        %1341 = vmatprep.subr.mxu0 0.0
        %1342 = vmatpush1.msra.mxu0 0.0
        %1343 = vmatprep.subr.mxu0 0.0
        %1344 = vmatpush1.msra.mxu0 0.0
        %1345 = vmatprep.subr.mxu0 0.0
        %1346 = vmatpush1.msra.mxu0 0.0
        %1347 = vmatprep.subr.mxu0 0.0
        %1348 = vmatpush1.msra.mxu0 0.0
        %1349 = vmatprep.subr.mxu0 0.0
        %1350 = vmatpush1.msra.mxu0 0.0
        %1351 = vmatprep.subr.mxu0 0.0
        %1352 = vmatpush1.msra.mxu0 0.0
        %1353 = vmatprep.subr.mxu0 0.0
        %1354 = vmatpush1.msra.mxu0 0.0
        %1355 = vmatprep.subr.mxu0 0.0
        %1356 = vmatpush1.msra.mxu0 0.0
        %1357 = vmatprep.subr.mxu0 0.0
        %1358 = vmatpush1.msra.mxu0 0.0
        %1359 = vmatprep.subr.mxu0 0.0
        %1360 = vmatpush1.msra.mxu0 0.0
        %1361 = vmatprep.subr.mxu0 0.0
        %1362 = vmatpush1.msra.mxu0 0.0
        %1363 = vmatprep.subr.mxu0 0.0
        %1364 = vmatpush1.msra.mxu0 0.0
        %1365 = vmatprep.subr.mxu0 0.0
        %1366 = vmatpush1.msra.mxu0 0.0
        %1367 = vmatprep.subr.mxu0 0.0
        %1368 = vmatpush1.msra.mxu0 0.0
        %1369 = vmatprep.subr.mxu0 0.0
        %1370 = vmatpush1.msra.mxu0 0.0
        %1371 = vmatprep.subr.mxu0 0.0
        %1372 = vmatpush1.msra.mxu0 0.0
        %1373 = vmatprep.subr.mxu0 0.0
        %1374 = vmatpush1.msra.mxu0 0.0
        %1375 = vmatprep.subr.mxu0 0.0
        %1376 = vmatpush1.msra.mxu0 0.0
        %1377 = vmatprep.subr.mxu0 0.0
        %1378 = vmatpush1.msra.mxu0 0.0
        %1379 = vmatprep.mubr.f32.mxu0 0.0
        %1380 = vmatmul.mubr.f32.gmra.mrb[0].mxu0 %v1313
        %v1381 = vpop.f32.mrb[0].mxu0
        %v1382 = vadd.f32 %v1310, %v1381
        %v1383 = vpop.f32.mrb[0].mxu0
        %1384 = vdwg.mxu0
        %vm1385 = vcmask 7168
        %1386 = vst.msk [vmem:[%s6] sm:$0xff] %vm1385, %v1382
      $region52: #{tpu_custom_call.1} parent=43 // pred_fallthru
        _
      // Predicated region
      $region53: #{tpu_custom_call.1} parent=43 // pred_check
        %p1387 = pneg %p163
      $region54: #{tpu_custom_call.1} parent=43 // pred_check_branch
        %1389 = sbr.rel (%p1387) target = $region56
      $region55: #{tpu_custom_call.1} parent=43 // pred_region
        _
      $region56: #{tpu_custom_call.1} parent=43 // pred_fallthru
        _
      // Predicated region
      $region57: #{tpu_custom_call.1} parent=43 // pred_check
        %p1390 = pneg %p163
      $region58: #{tpu_custom_call.1} parent=43 // pred_check_branch
        %1392 = sbr.rel (%p1390) target = $region60
      $region59: #{tpu_custom_call.1} parent=43 // pred_region
        _
      $region60: #{tpu_custom_call.1} parent=43 // pred_fallthru
        _
    $region44: #{tpu_custom_call.1} parent=5 // pred_fallthru
      _
    %p1393 = scmp.le.s32.totalorder 2, %s14
    // Predicated region
    $region61: #{tpu_custom_call.1} parent=5 // pred_check
      %p1394 = pneg %p1393
    $region62: #{tpu_custom_call.1} parent=5 // pred_check_branch
      %1396 = sbr.rel (%p1394) target = $region64
    $region63: #{tpu_custom_call.1} parent=5 // pred_region
      %s1397 = ssub.s32 %s14, 2
    $region64: #{tpu_custom_call.1} parent=5 // pred_fallthru
      _
  $region6: #{tpu_custom_call.1} parent=0 // loop_footer
    %s18 = sadd.s32 1, %s14
  $region7: #{tpu_custom_call.1} parent=0 // loop_footer_branch
    %13 = sbr.rel target = $region3
  $region8: #{tpu_custom_call.1} parent=0 // loop_exit
    _

</llo_original>
